<compile_context>
chip_gen: v7x
topology: tpu7x:2x2x1
jax: 0.10.0
libtpu: 0.0.40
codegen_flags: <defaults>
</compile_context>

<pallas_src>
import math
import functools

import jax
import jax.numpy as jnp
from jax.experimental import pallas as pl
from jax.experimental.pallas import tpu as pltpu


def _round_up(a, m):
    return ((a + m - 1) // m) * m


# ----------------------------------------------------------------------------
# Tiled linear projection kernel:  out = x @ W + b
# ----------------------------------------------------------------------------
def _linear_kernel(x_ref, w_ref, b_ref, o_ref, acc_ref):
    k = pl.program_id(2)

    @pl.when(k == 0)
    def _():
        acc_ref[...] = jnp.zeros_like(acc_ref)

    acc_ref[...] += jnp.dot(x_ref[...], w_ref[...],
                            preferred_element_type=jnp.float32)

    @pl.when(k == pl.num_programs(2) - 1)
    def _():
        o_ref[...] = (acc_ref[...] + b_ref[...].astype(jnp.float32)
                      ).astype(o_ref.dtype)


def pallas_linear(x2d, w, b, *, tm=512, tn=512, tk=1024):
    """x2d: (M, K), w: (K, N), b: (N,) -> (M, N).

    Tiled + double-buffered matmul.  Default tiles (512, 512, 1024) are
    ~11 MiB with double buffering -> inside the default scoped-VMEM limit on
    v5e/v6e/v7x.  Inputs are zero-padded only when shapes are not tile
    multiples (production E/C are multiples of 128 so the pad never fires;
    the tiny demo shapes below do pad, which is negligible there).
    """
    M, K = x2d.shape
    K2, N = w.shape
    assert K == K2, (K, K2)

    tm = min(tm, _round_up(M, 8))
    tn = min(tn, _round_up(N, 128))
    tk = min(tk, _round_up(K, 128))

    Mp, Np, Kp = _round_up(M, tm), _round_up(N, tn), _round_up(K, tk)

    xp = x2d if (Mp == M and Kp == K) else jnp.pad(x2d, ((0, Mp - M), (0, Kp - K)))
    wp = w if (Kp == K and Np == N) else jnp.pad(w, ((0, Kp - K), (0, Np - N)))
    bp = b if Np == N else jnp.pad(b, (0, Np - N))
    bp = bp.reshape(1, Np)

    grid = (Mp // tm, Np // tn, Kp // tk)

    out = pl.pallas_call(
        _linear_kernel,
        out_shape=jax.ShapeDtypeStruct((Mp, Np), x2d.dtype),
        grid=grid,
        in_specs=[
            pl.BlockSpec((tm, tk), lambda i, j, k: (i, k)),
            pl.BlockSpec((tk, tn), lambda i, j, k: (k, j)),
            pl.BlockSpec((1, tn), lambda i, j, k: (0, j)),
        ],
        out_specs=pl.BlockSpec((tm, tn), lambda i, j, k: (i, j)),
        scratch_shapes=[pltpu.VMEM((tm, tn), jnp.float32)],
        compiler_params=pltpu.CompilerParams(
            dimension_semantics=("parallel", "parallel", "arbitrary")),
    )(xp, wp, bp)

    if Mp != M or Np != N:
        out = out[:M, :N]
    return out


# ----------------------------------------------------------------------------
# Attention kernel: one (batch, q-tile) per grid step, all heads batched.
#   q_ref:  (1, tq, E)     -- scaled queries, channels-last
#   kv_ref: (1, Skv, 2E)   -- packed [K | V] projection output (VMEM-resident
#                             across q-tiles of the same batch element)
#   o_ref:  (1, tq, E)
# ----------------------------------------------------------------------------
def _attn_kernel(q_ref, kv_ref, o_ref, *, n_heads, d_head, d_embed):
    tq = q_ref.shape[1]
    skv = kv_ref.shape[1]

    q = q_ref[0]                                   # (tq, E), scale pre-folded
    kv = kv_ref[0]                                 # (Skv, 2E)

    # Head split: reshape + leading-axis transpose (minor dim unchanged).
    qh = q.reshape(tq, n_heads, d_head).transpose(1, 0, 2)              # (H, tq, Dh)
    kh = kv[:, :d_embed].reshape(skv, n_heads, d_head).transpose(1, 0, 2)
    vh = kv[:, d_embed:].reshape(skv, n_heads, d_head).transpose(1, 0, 2)

    # Batched scores over all heads (no k.T materialization, no per-head loop).
    s = jnp.einsum("hqd,hkd->hqk", qh, kh,
                   preferred_element_type=jnp.float32)                  # (H, tq, Skv)

    m = jnp.max(s, axis=-1, keepdims=True)
    p = jnp.exp(s - m)
    denom = jnp.sum(p, axis=-1, keepdims=True)                          # (H, tq, 1)

    o = jnp.einsum("hqk,hkd->hqd", p.astype(vh.dtype), vh,
                   preferred_element_type=jnp.float32)                  # (H, tq, Dh)
    # Exact normalization (divide the small (H,tq,1) denom, broadcast-mul).
    o = o * (1.0 / denom)

    # Single full-width lane-dense store per grid step.
    o = o.transpose(1, 0, 2).reshape(tq, d_embed)                       # (tq, E)
    o_ref[0] = o.astype(o_ref.dtype)


def pallas_attention(q, kv, n_heads, d_head, *, tq=256):
    """q: (B, Sq, E) (already scaled by 1/sqrt(Dh) via the folded weights),
    kv: (B, Skv, 2E) packed [K|V] -> (B, Sq, E)."""
    B, Sq, E = q.shape
    Skv = kv.shape[1]

    tq = min(tq, _round_up(Sq, 8))
    Sq_p = _round_up(Sq, tq)
    qp = q if Sq_p == Sq else jnp.pad(q, ((0, 0), (0, Sq_p - Sq), (0, 0)))

    kernel = functools.partial(
        _attn_kernel, n_heads=n_heads, d_head=d_head, d_embed=E)

    out = pl.pallas_call(
        kernel,
        out_shape=jax.ShapeDtypeStruct((B, Sq_p, E), q.dtype),
        grid=(B, Sq_p // tq),                       # q-tile axis innermost
        in_specs=[
            pl.BlockSpec((1, tq, E), lambda b, i: (b, i, 0)),
            pl.BlockSpec((1, Skv, 2 * E), lambda b, i: (b, 0, 0)),  # resident
        ],
        out_specs=pl.BlockSpec((1, tq, E), lambda b, i: (b, i, 0)),
        compiler_params=pltpu.CompilerParams(
            dimension_semantics=("parallel", "parallel")),
    )(qp, kv)

    if Sq_p != Sq:
        out = out[:, :Sq, :]
    return out


# ----------------------------------------------------------------------------
# Parameter prep (done ONCE, outside the hot path):
#   * fold 1/sqrt(d_head) into wq/bq
#   * concatenate K/V weights into a single fused (C, 2E) projection
# ----------------------------------------------------------------------------
def prepare_params(params, n_heads):
    d_embed = params["wq"].shape[0]
    d_head = d_embed // n_heads
    scale = 1.0 / math.sqrt(d_head)
    return {
        "wq": params["wq"] * scale,
        "bq": params["bq"] * scale,
        "wkv": jnp.concatenate([params["wk"], params["wv"]], axis=1),   # (C, 2E)
        "bkv": jnp.concatenate([params["bk"], params["bv"]], axis=0),   # (2E,)
        "wo": params["wo"],
        "bo": params["bo"],
    }


# ----------------------------------------------------------------------------
# Full CrossAttention forward (xformers path of the PyTorch module)
# ----------------------------------------------------------------------------
def cross_attention_forward(prepared, x, y, n_heads):
    B, Sq, E = x.shape
    _, Skv, C = y.shape
    d_head = E // n_heads

    q = pallas_linear(x.reshape(B * Sq, E),
                      prepared["wq"], prepared["bq"]).reshape(B, Sq, E)
    kv = pallas_linear(y.reshape(B * Skv, C),
                       prepared["wkv"], prepared["bkv"]).reshape(B, Skv, 2 * E)

    # Attention in channels-last layout: no head split/merge transposes in HBM.
    o = pallas_attention(q, kv, n_heads, d_head)                        # (B, Sq, E)

    out = pallas_linear(o.reshape(B * Sq, E),
                        prepared["wo"], prepared["bo"]).reshape(B, Sq, E)
    return out


# Pure-JAX reference for verification (raw, unscaled params; HIGHEST precision
# so the oracle itself is accurate f32 on hardware).
def cross_attention_ref(params, x, y, n_heads):
    hp = jax.lax.Precision.HIGHEST
    B, Sq, E = x.shape
    _, Skv, C = y.shape
    d_head = E // n_heads
    q = jnp.dot(x, params["wq"], precision=hp) + params["bq"]
    k = jnp.dot(y, params["wk"], precision=hp) + params["bk"]
    v = jnp.dot(y, params["wv"], precision=hp) + params["bv"]

    def split(t, S):
        return t.reshape(B, S, n_heads, d_head).transpose(0, 2, 1, 3)

    qh, kh, vh = split(q, Sq), split(k, Skv), split(v, Skv)
    s = jnp.einsum("bhqd,bhkd->bhqk", qh, kh, precision=hp) / math.sqrt(d_head)
    p = jax.nn.softmax(s, axis=-1)
    o = jnp.einsum("bhqk,bhkd->bhqd", p, vh, precision=hp)
    o = o.transpose(0, 2, 1, 3).reshape(B, Sq, E)
    return jnp.dot(o, params["wo"], precision=hp) + params["bo"]


def init_params(key, d_embed, d_cross):
    ks = jax.random.split(key, 8)
    s_e = 1.0 / math.sqrt(d_embed)
    s_c = 1.0 / math.sqrt(d_cross)
    return {
        "wq": jax.random.normal(ks[0], (d_embed, d_embed), jnp.float32) * s_e,
        "bq": jax.random.normal(ks[1], (d_embed,), jnp.float32) * s_e,
        "wk": jax.random.normal(ks[2], (d_cross, d_embed), jnp.float32) * s_c,
        "bk": jax.random.normal(ks[3], (d_embed,), jnp.float32) * s_c,
        "wv": jax.random.normal(ks[4], (d_cross, d_embed), jnp.float32) * s_c,
        "bv": jax.random.normal(ks[5], (d_embed,), jnp.float32) * s_c,
        "wo": jax.random.normal(ks[6], (d_embed, d_embed), jnp.float32) * s_e,
        "bo": jax.random.normal(ks[7], (d_embed,), jnp.float32) * s_e,
    }


if __name__ == "__main__":
    B, Sq, Skv = 2, 16, 8
    n_heads, d_embed, d_cross = 4, 32, 16

    key = jax.random.PRNGKey(0)
    kx, ky, kp = jax.random.split(key, 3)
    x = jax.random.normal(kx, (B, Sq, d_embed), jnp.float32)
    y = jax.random.normal(ky, (B, Skv, d_cross), jnp.float32)
    params = init_params(kp, d_embed, d_cross)

    prepared = prepare_params(params, n_heads)   # one-time weight prep

    fwd = jax.jit(cross_attention_forward, static_argnames=("n_heads",))
    out = fwd(prepared, x, y, n_heads=n_heads)
    out = jax.block_until_ready(out)

    ref = cross_attention_ref(params, x, y, n_heads)
    assert out.shape == (B, Sq, d_embed)
    max_err = float(jnp.max(jnp.abs(out - ref)))
    # The softmax is now exactly normalized (the previous approx-reciprocal
    # mismatch is gone): interpret-mode error is ~1e-6.  The tolerance below
    # only leaves headroom for default-precision MXU operand rounding on real
    # hardware versus the HIGHEST-precision f32 reference.
    assert jnp.allclose(out, ref, atol=1e-2, rtol=1e-2), \
        f"mismatch vs reference (max abs err {max_err})"

    print("KERNEL_OK")
</pallas_src>

<mosaic_0001>
module attributes {stable_mosaic.version = 11 : i64} {
  func.func @_linear_kernel(%arg0: i32, %arg1: i32, %arg2: i32, %arg3: memref<32x128xf32, #tpu.memory_space<vmem>>, %arg4: memref<128x128xf32, #tpu.memory_space<vmem>>, %arg5: memref<1x128xf32, #tpu.memory_space<vmem>>, %arg6: memref<32x128xf32, #tpu.memory_space<vmem>>, %arg7: memref<32x128xf32, #tpu.memory_space<vmem>>) attributes {dimension_semantics = [#tpu.dimension_semantics<parallel>, #tpu.dimension_semantics<parallel>, #tpu.dimension_semantics<arbitrary>], iteration_bounds = array<i64: 1, 1, 1>, scalar_prefetch = 0 : i64, scratch_operands = 1 : i64, tpu.core_type = #tpu.core_type<tc>, window_params = [{transform_indices = @transform_0, window_bounds = array<i64: 32, 128>}, {transform_indices = @transform_1, window_bounds = array<i64: 128, 128>}, {transform_indices = @transform_2, window_bounds = array<i64: 1, 128>}, {transform_indices = @transform_3, window_bounds = array<i64: 32, 128>}]} {
    %c0_i32 = arith.constant 0 : i32
    %0 = arith.cmpi eq, %arg2, %c0_i32 : i32
    %1 = arith.extui %0 : i1 to i32
    %c0_i32_0 = arith.constant 0 : i32
    %2 = arith.cmpi ne, %1, %c0_i32_0 : i32
    scf.if %2 {
      %cst_10 = arith.constant 0.000000e+00 : f32
      %12 = vector.broadcast %cst_10 : f32 to vector<32x128xf32>
      %c0_11 = arith.constant 0 : index
      %c0_12 = arith.constant 0 : index
      %13 = vector.load %arg7[%c0_11, %c0_12] : memref<32x128xf32, #tpu.memory_space<vmem>>, vector<32x128xf32>
      tpu.vector_store %arg7[%c0_11, %c0_12], %12 {strides = array<i32>} : memref<32x128xf32, #tpu.memory_space<vmem>>, vector<32x128xf32>,
    } else {
    }
    %c0 = arith.constant 0 : index
    %c0_1 = arith.constant 0 : index
    %3 = vector.load %arg7[%c0, %c0_1] : memref<32x128xf32, #tpu.memory_space<vmem>>, vector<32x128xf32>
    %c0_2 = arith.constant 0 : index
    %c0_3 = arith.constant 0 : index
    %4 = vector.load %arg3[%c0_2, %c0_3] : memref<32x128xf32, #tpu.memory_space<vmem>>, vector<32x128xf32>
    %c0_4 = arith.constant 0 : index
    %c0_5 = arith.constant 0 : index
    %5 = vector.load %arg4[%c0_4, %c0_5] : memref<128x128xf32, #tpu.memory_space<vmem>>, vector<128x128xf32>
    %cst = arith.constant dense<0.000000e+00> : vector<32x128xf32>
    %6 = tpu.matmul %4, %5, %cst {dimension_numbers = #tpu.dot_dimension_numbers<[1], [0], [0], [1], [0, 0, 1, 1], [], []>} : vector<32x128xf32>, vector<128x128xf32>, vector<32x128xf32> -> vector<32x128xf32>
    %7 = arith.addf %3, %6 : vector<32x128xf32>
    %c0_6 = arith.constant 0 : index
    %c0_7 = arith.constant 0 : index
    %8 = vector.load %arg7[%c0_6, %c0_7] : memref<32x128xf32, #tpu.memory_space<vmem>>, vector<32x128xf32>
    tpu.vector_store %arg7[%c0_6, %c0_7], %7 {strides = array<i32>} : memref<32x128xf32, #tpu.memory_space<vmem>>, vector<32x128xf32>,
    %c0_i32_8 = arith.constant 0 : i32
    %9 = arith.cmpi eq, %arg2, %c0_i32_8 : i32
    %10 = arith.extui %9 : i1 to i32
    %c0_i32_9 = arith.constant 0 : i32
    %11 = arith.cmpi ne, %10, %c0_i32_9 : i32
    scf.if %11 {
      %c0_10 = arith.constant 0 : index
      %c0_11 = arith.constant 0 : index
      %12 = vector.load %arg7[%c0_10, %c0_11] : memref<32x128xf32, #tpu.memory_space<vmem>>, vector<32x128xf32>
      %c0_12 = arith.constant 0 : index
      %c0_13 = arith.constant 0 : index
      %13 = vector.load %arg5[%c0_12, %c0_13] : memref<1x128xf32, #tpu.memory_space<vmem>>, vector<1x128xf32>
      %14 = vector.broadcast %13 : vector<1x128xf32> to vector<32x128xf32>
      %15 = arith.addf %12, %14 : vector<32x128xf32>
      %c0_14 = arith.constant 0 : index
      %c0_15 = arith.constant 0 : index
      %16 = vector.load %arg6[%c0_14, %c0_15] : memref<32x128xf32, #tpu.memory_space<vmem>>, vector<32x128xf32>
      tpu.vector_store %arg6[%c0_14, %c0_15], %15 {strides = array<i32>} : memref<32x128xf32, #tpu.memory_space<vmem>>, vector<32x128xf32>,
    } else {
    }
    return
  }
  func.func @transform_0(%arg0: i32, %arg1: i32, %arg2: i32) -> (i32, i32) {
    %c0_i32 = arith.constant 0 : i32
    return %arg0, %arg2 : i32, i32
  }
  func.func @transform_1(%arg0: i32, %arg1: i32, %arg2: i32) -> (i32, i32) {
    %c0_i32 = arith.constant 0 : i32
    return %arg2, %arg1 : i32, i32
  }
  func.func @transform_2(%arg0: i32, %arg1: i32, %arg2: i32) -> (i32, i32) {
    %c0_i32 = arith.constant 0 : i32
    %c0_i32_0 = arith.constant 0 : i32
    return %c0_i32, %arg1 : i32, i32
  }
  func.func @transform_3(%arg0: i32, %arg1: i32, %arg2: i32) -> (i32, i32) {
    %c0_i32 = arith.constant 0 : i32
    return %arg0, %arg1 : i32, i32
  }
}

module attributes {stable_mosaic.version = 11 : i64} {
  func.func @_linear_kernel(%arg0: i32, %arg1: i32, %arg2: i32, %arg3: memref<16x128xf32, #tpu.memory_space<vmem>>, %arg4: memref<128x128xf32, #tpu.memory_space<vmem>>, %arg5: memref<1x128xf32, #tpu.memory_space<vmem>>, %arg6: memref<16x128xf32, #tpu.memory_space<vmem>>, %arg7: memref<16x128xf32, #tpu.memory_space<vmem>>) attributes {dimension_semantics = [#tpu.dimension_semantics<parallel>, #tpu.dimension_semantics<parallel>, #tpu.dimension_semantics<arbitrary>], iteration_bounds = array<i64: 1, 1, 1>, scalar_prefetch = 0 : i64, scratch_operands = 1 : i64, tpu.core_type = #tpu.core_type<tc>, window_params = [{transform_indices = @transform_0, window_bounds = array<i64: 16, 128>}, {transform_indices = @transform_1, window_bounds = array<i64: 128, 128>}, {transform_indices = @transform_2, window_bounds = array<i64: 1, 128>}, {transform_indices = @transform_3, window_bounds = array<i64: 16, 128>}]} {
    %c0_i32 = arith.constant 0 : i32
    %0 = arith.cmpi eq, %arg2, %c0_i32 : i32
    %1 = arith.extui %0 : i1 to i32
    %c0_i32_0 = arith.constant 0 : i32
    %2 = arith.cmpi ne, %1, %c0_i32_0 : i32
    scf.if %2 {
      %cst_10 = arith.constant 0.000000e+00 : f32
      %12 = vector.broadcast %cst_10 : f32 to vector<16x128xf32>
      %c0_11 = arith.constant 0 : index
      %c0_12 = arith.constant 0 : index
      %13 = vector.load %arg7[%c0_11, %c0_12] : memref<16x128xf32, #tpu.memory_space<vmem>>, vector<16x128xf32>
      tpu.vector_store %arg7[%c0_11, %c0_12], %12 {strides = array<i32>} : memref<16x128xf32, #tpu.memory_space<vmem>>, vector<16x128xf32>,
    } else {
    }
    %c0 = arith.constant 0 : index
    %c0_1 = arith.constant 0 : index
    %3 = vector.load %arg7[%c0, %c0_1] : memref<16x128xf32, #tpu.memory_space<vmem>>, vector<16x128xf32>
    %c0_2 = arith.constant 0 : index
    %c0_3 = arith.constant 0 : index
    %4 = vector.load %arg3[%c0_2, %c0_3] : memref<16x128xf32, #tpu.memory_space<vmem>>, vector<16x128xf32>
    %c0_4 = arith.constant 0 : index
    %c0_5 = arith.constant 0 : index
    %5 = vector.load %arg4[%c0_4, %c0_5] : memref<128x128xf32, #tpu.memory_space<vmem>>, vector<128x128xf32>
    %cst = arith.constant dense<0.000000e+00> : vector<16x128xf32>
    %6 = tpu.matmul %4, %5, %cst {dimension_numbers = #tpu.dot_dimension_numbers<[1], [0], [0], [1], [0, 0, 1, 1], [], []>} : vector<16x128xf32>, vector<128x128xf32>, vector<16x128xf32> -> vector<16x128xf32>
    %7 = arith.addf %3, %6 : vector<16x128xf32>
    %c0_6 = arith.constant 0 : index
    %c0_7 = arith.constant 0 : index
    %8 = vector.load %arg7[%c0_6, %c0_7] : memref<16x128xf32, #tpu.memory_space<vmem>>, vector<16x128xf32>
    tpu.vector_store %arg7[%c0_6, %c0_7], %7 {strides = array<i32>} : memref<16x128xf32, #tpu.memory_space<vmem>>, vector<16x128xf32>,
    %c0_i32_8 = arith.constant 0 : i32
    %9 = arith.cmpi eq, %arg2, %c0_i32_8 : i32
    %10 = arith.extui %9 : i1 to i32
    %c0_i32_9 = arith.constant 0 : i32
    %11 = arith.cmpi ne, %10, %c0_i32_9 : i32
    scf.if %11 {
      %c0_10 = arith.constant 0 : index
      %c0_11 = arith.constant 0 : index
      %12 = vector.load %arg7[%c0_10, %c0_11] : memref<16x128xf32, #tpu.memory_space<vmem>>, vector<16x128xf32>
      %c0_12 = arith.constant 0 : index
      %c0_13 = arith.constant 0 : index
      %13 = vector.load %arg5[%c0_12, %c0_13] : memref<1x128xf32, #tpu.memory_space<vmem>>, vector<1x128xf32>
      %14 = vector.broadcast %13 : vector<1x128xf32> to vector<16x128xf32>
      %15 = arith.addf %12, %14 : vector<16x128xf32>
      %c0_14 = arith.constant 0 : index
      %c0_15 = arith.constant 0 : index
      %16 = vector.load %arg6[%c0_14, %c0_15] : memref<16x128xf32, #tpu.memory_space<vmem>>, vector<16x128xf32>
      tpu.vector_store %arg6[%c0_14, %c0_15], %15 {strides = array<i32>} : memref<16x128xf32, #tpu.memory_space<vmem>>, vector<16x128xf32>,
    } else {
    }
    return
  }
  func.func @transform_0(%arg0: i32, %arg1: i32, %arg2: i32) -> (i32, i32) {
    %c0_i32 = arith.constant 0 : i32
    return %arg0, %arg2 : i32, i32
  }
  func.func @transform_1(%arg0: i32, %arg1: i32, %arg2: i32) -> (i32, i32) {
    %c0_i32 = arith.constant 0 : i32
    return %arg2, %arg1 : i32, i32
  }
  func.func @transform_2(%arg0: i32, %arg1: i32, %arg2: i32) -> (i32, i32) {
    %c0_i32 = arith.constant 0 : i32
    %c0_i32_0 = arith.constant 0 : i32
    return %c0_i32, %arg1 : i32, i32
  }
  func.func @transform_3(%arg0: i32, %arg1: i32, %arg2: i32) -> (i32, i32) {
    %c0_i32 = arith.constant 0 : i32
    return %arg0, %arg1 : i32, i32
  }
}

module attributes {stable_mosaic.version = 11 : i64} {
  func.func @_attn_kernel(%arg0: i32, %arg1: i32, %arg2: memref<1x16x32xf32, #tpu.memory_space<vmem>>, %arg3: memref<1x8x64xf32, #tpu.memory_space<vmem>>, %arg4: memref<1x16x32xf32, #tpu.memory_space<vmem>>) attributes {dimension_semantics = [#tpu.dimension_semantics<parallel>, #tpu.dimension_semantics<parallel>], iteration_bounds = array<i64: 2, 1>, scalar_prefetch = 0 : i64, scratch_operands = 0 : i64, tpu.core_type = #tpu.core_type<tc>, window_params = [{transform_indices = @transform_0, window_bounds = array<i64: 1, 16, 32>}, {transform_indices = @transform_1, window_bounds = array<i64: 1, 8, 64>}, {transform_indices = @transform_2, window_bounds = array<i64: 1, 16, 32>}]} {
    %c0 = arith.constant 0 : index
    %c0_0 = arith.constant 0 : index
    %c0_1 = arith.constant 0 : index
    %0 = vector.load %arg2[%c0, %c0_0, %c0_1] : memref<1x16x32xf32, #tpu.memory_space<vmem>>, vector<1x16x32xf32>
    %1 = vector.shape_cast %0 : vector<1x16x32xf32> to vector<16x32xf32>
    %c0_2 = arith.constant 0 : index
    %c0_3 = arith.constant 0 : index
    %c0_4 = arith.constant 0 : index
    %2 = vector.load %arg3[%c0_2, %c0_3, %c0_4] : memref<1x8x64xf32, #tpu.memory_space<vmem>>, vector<1x8x64xf32>
    %3 = vector.shape_cast %2 : vector<1x8x64xf32> to vector<8x64xf32>
    %4 = vector.shape_cast %1 : vector<16x32xf32> to vector<16x4x8xf32>
    %5 = tpu.transpose %4, [1, 0, 2] : vector<16x4x8xf32> -> vector<4x16x8xf32>
    %6 = vector.extract_strided_slice %3 {offsets = [0, 0], sizes = [8, 32], strides = [1, 1]} : vector<8x64xf32> to vector<8x32xf32>
    %7 = vector.shape_cast %6 : vector<8x32xf32> to vector<8x4x8xf32>
    %8 = tpu.transpose %7, [1, 0, 2] : vector<8x4x8xf32> -> vector<4x8x8xf32>
    %9 = vector.extract_strided_slice %3 {offsets = [0, 32], sizes = [8, 32], strides = [1, 1]} : vector<8x64xf32> to vector<8x32xf32>
    %10 = vector.shape_cast %9 : vector<8x32xf32> to vector<8x4x8xf32>
    %11 = tpu.transpose %10, [1, 0, 2] : vector<8x4x8xf32> -> vector<4x8x8xf32>
    "tpu.trace_start"() <{level = 10 : i32, message = "hqd,hkd->hqk"}> : () -> ()
    %cst = arith.constant dense<0.000000e+00> : vector<4x16x8xf32>
    %12 = tpu.matmul %5, %8, %cst {dimension_numbers = #tpu.dot_dimension_numbers<[2], [2], [1], [1], [0, 0, 0, 1, 1, 1], [0], [0]>} : vector<4x16x8xf32>, vector<4x8x8xf32>, vector<4x16x8xf32> -> vector<4x16x8xf32>
    "tpu.trace_stop"() : () -> ()
    %cst_5 = arith.constant dense<0xFF800000> : vector<4x16xf32>
    %13 = vector.multi_reduction <maximumf>, %12, %cst_5 [2] : vector<4x16x8xf32> to vector<4x16xf32>
    %14 = vector.shape_cast %13 : vector<4x16xf32> to vector<4x16x1xf32>
    %15 = vector.broadcast %14 : vector<4x16x1xf32> to vector<4x16x8xf32>
    %16 = arith.subf %12, %15 : vector<4x16x8xf32>
    %17 = math.exp %16 : vector<4x16x8xf32>
    %cst_6 = arith.constant dense<0.000000e+00> : vector<4x16xf32>
    %18 = vector.multi_reduction <add>, %17, %cst_6 [2] : vector<4x16x8xf32> to vector<4x16xf32>
    %19 = vector.shape_cast %18 : vector<4x16xf32> to vector<4x16x1xf32>
    "tpu.trace_start"() <{level = 10 : i32, message = "hqk,hkd->hqd"}> : () -> ()
    %cst_7 = arith.constant dense<0.000000e+00> : vector<4x16x8xf32>
    %20 = tpu.matmul %17, %11, %cst_7 {dimension_numbers = #tpu.dot_dimension_numbers<[2], [1], [1], [2], [0, 0, 0, 1, 1, 2], [0], [0]>} : vector<4x16x8xf32>, vector<4x8x8xf32>, vector<4x16x8xf32> -> vector<4x16x8xf32>
    "tpu.trace_stop"() : () -> ()
    %cst_8 = arith.constant 1.000000e+00 : f32
    %21 = vector.broadcast %cst_8 : f32 to vector<4x16x1xf32>
    %22 = arith.divf %21, %19 : vector<4x16x1xf32>
    %23 = vector.broadcast %22 : vector<4x16x1xf32> to vector<4x16x8xf32>
    %24 = arith.mulf %20, %23 : vector<4x16x8xf32>
    %25 = tpu.transpose %24, [1, 0, 2] : vector<4x16x8xf32> -> vector<16x4x8xf32>
    %26 = vector.shape_cast %25 : vector<16x4x8xf32> to vector<16x32xf32>
    %c0_9 = arith.constant 0 : index
    %c0_10 = arith.constant 0 : index
    %c0_11 = arith.constant 0 : index
    %27 = vector.load %arg4[%c0_9, %c0_10, %c0_11] : memref<1x16x32xf32, #tpu.memory_space<vmem>>, vector<1x16x32xf32>
    %28 = vector.shape_cast %27 : vector<1x16x32xf32> to vector<16x32xf32>
    %29 = vector.shape_cast %26 : vector<16x32xf32> to vector<1x16x32xf32>
    tpu.vector_store %arg4[%c0_9, %c0_10, %c0_11], %29 {strides = array<i32>} : memref<1x16x32xf32, #tpu.memory_space<vmem>>, vector<1x16x32xf32>,
    return
  }
  func.func @transform_0(%arg0: i32, %arg1: i32) -> (i32, i32, i32) {
    %c0_i32 = arith.constant 0 : i32
    %c0_i32_0 = arith.constant 0 : i32
    return %arg0, %arg1, %c0_i32 : i32, i32, i32
  }
  func.func @transform_1(%arg0: i32, %arg1: i32) -> (i32, i32, i32) {
    %c0_i32 = arith.constant 0 : i32
    %c0_i32_0 = arith.constant 0 : i32
    %c0_i32_1 = arith.constant 0 : i32
    return %arg0, %c0_i32, %c0_i32_0 : i32, i32, i32
  }
  func.func @transform_2(%arg0: i32, %arg1: i32) -> (i32, i32, i32) {
    %c0_i32 = arith.constant 0 : i32
    %c0_i32_0 = arith.constant 0 : i32
    return %arg0, %arg1, %c0_i32 : i32, i32, i32
  }
}

module attributes {stable_mosaic.version = 11 : i64} {
  func.func @_linear_kernel(%arg0: i32, %arg1: i32, %arg2: i32, %arg3: memref<32x128xf32, #tpu.memory_space<vmem>>, %arg4: memref<128x128xf32, #tpu.memory_space<vmem>>, %arg5: memref<1x128xf32, #tpu.memory_space<vmem>>, %arg6: memref<32x128xf32, #tpu.memory_space<vmem>>, %arg7: memref<32x128xf32, #tpu.memory_space<vmem>>) attributes {dimension_semantics = [#tpu.dimension_semantics<parallel>, #tpu.dimension_semantics<parallel>, #tpu.dimension_semantics<arbitrary>], iteration_bounds = array<i64: 1, 1, 1>, scalar_prefetch = 0 : i64, scratch_operands = 1 : i64, tpu.core_type = #tpu.core_type<tc>, window_params = [{transform_indices = @transform_0, window_bounds = array<i64: 32, 128>}, {transform_indices = @transform_1, window_bounds = array<i64: 128, 128>}, {transform_indices = @transform_2, window_bounds = array<i64: 1, 128>}, {transform_indices = @transform_3, window_bounds = array<i64: 32, 128>}]} {
    %c0_i32 = arith.constant 0 : i32
    %0 = arith.cmpi eq, %arg2, %c0_i32 : i32
    %1 = arith.extui %0 : i1 to i32
    %c0_i32_0 = arith.constant 0 : i32
    %2 = arith.cmpi ne, %1, %c0_i32_0 : i32
    scf.if %2 {
      %cst_10 = arith.constant 0.000000e+00 : f32
      %12 = vector.broadcast %cst_10 : f32 to vector<32x128xf32>
      %c0_11 = arith.constant 0 : index
      %c0_12 = arith.constant 0 : index
      %13 = vector.load %arg7[%c0_11, %c0_12] : memref<32x128xf32, #tpu.memory_space<vmem>>, vector<32x128xf32>
      tpu.vector_store %arg7[%c0_11, %c0_12], %12 {strides = array<i32>} : memref<32x128xf32, #tpu.memory_space<vmem>>, vector<32x128xf32>,
    } else {
    }
    %c0 = arith.constant 0 : index
    %c0_1 = arith.constant 0 : index
    %3 = vector.load %arg7[%c0, %c0_1] : memref<32x128xf32, #tpu.memory_space<vmem>>, vector<32x128xf32>
    %c0_2 = arith.constant 0 : index
    %c0_3 = arith.constant 0 : index
    %4 = vector.load %arg3[%c0_2, %c0_3] : memref<32x128xf32, #tpu.memory_space<vmem>>, vector<32x128xf32>
    %c0_4 = arith.constant 0 : index
    %c0_5 = arith.constant 0 : index
    %5 = vector.load %arg4[%c0_4, %c0_5] : memref<128x128xf32, #tpu.memory_space<vmem>>, vector<128x128xf32>
    %cst = arith.constant dense<0.000000e+00> : vector<32x128xf32>
    %6 = tpu.matmul %4, %5, %cst {dimension_numbers = #tpu.dot_dimension_numbers<[1], [0], [0], [1], [0, 0, 1, 1], [], []>} : vector<32x128xf32>, vector<128x128xf32>, vector<32x128xf32> -> vector<32x128xf32>
    %7 = arith.addf %3, %6 : vector<32x128xf32>
    %c0_6 = arith.constant 0 : index
    %c0_7 = arith.constant 0 : index
    %8 = vector.load %arg7[%c0_6, %c0_7] : memref<32x128xf32, #tpu.memory_space<vmem>>, vector<32x128xf32>
    tpu.vector_store %arg7[%c0_6, %c0_7], %7 {strides = array<i32>} : memref<32x128xf32, #tpu.memory_space<vmem>>, vector<32x128xf32>,
    %c0_i32_8 = arith.constant 0 : i32
    %9 = arith.cmpi eq, %arg2, %c0_i32_8 : i32
    %10 = arith.extui %9 : i1 to i32
    %c0_i32_9 = arith.constant 0 : i32
    %11 = arith.cmpi ne, %10, %c0_i32_9 : i32
    scf.if %11 {
      %c0_10 = arith.constant 0 : index
      %c0_11 = arith.constant 0 : index
      %12 = vector.load %arg7[%c0_10, %c0_11] : memref<32x128xf32, #tpu.memory_space<vmem>>, vector<32x128xf32>
      %c0_12 = arith.constant 0 : index
      %c0_13 = arith.constant 0 : index
      %13 = vector.load %arg5[%c0_12, %c0_13] : memref<1x128xf32, #tpu.memory_space<vmem>>, vector<1x128xf32>
      %14 = vector.broadcast %13 : vector<1x128xf32> to vector<32x128xf32>
      %15 = arith.addf %12, %14 : vector<32x128xf32>
      %c0_14 = arith.constant 0 : index
      %c0_15 = arith.constant 0 : index
      %16 = vector.load %arg6[%c0_14, %c0_15] : memref<32x128xf32, #tpu.memory_space<vmem>>, vector<32x128xf32>
      tpu.vector_store %arg6[%c0_14, %c0_15], %15 {strides = array<i32>} : memref<32x128xf32, #tpu.memory_space<vmem>>, vector<32x128xf32>,
    } else {
    }
    return
  }
  func.func @transform_0(%arg0: i32, %arg1: i32, %arg2: i32) -> (i32, i32) {
    %c0_i32 = arith.constant 0 : i32
    return %arg0, %arg2 : i32, i32
  }
  func.func @transform_1(%arg0: i32, %arg1: i32, %arg2: i32) -> (i32, i32) {
    %c0_i32 = arith.constant 0 : i32
    return %arg2, %arg1 : i32, i32
  }
  func.func @transform_2(%arg0: i32, %arg1: i32, %arg2: i32) -> (i32, i32) {
    %c0_i32 = arith.constant 0 : i32
    %c0_i32_0 = arith.constant 0 : i32
    return %c0_i32, %arg1 : i32, i32
  }
  func.func @transform_3(%arg0: i32, %arg1: i32, %arg2: i32) -> (i32, i32) {
    %c0_i32 = arith.constant 0 : i32
    return %arg0, %arg1 : i32, i32
  }
}

</mosaic_0001>

<llo_original>
// kernel: cross_attention_forward.5
$region0: #{cross_attention_forward.5}
  #allocation0 [shape = 'u32[]', space=smem, size = 0x4, offset = 0x4, fixed_abs, tag = 'smem constant byte address 0x4 - core index']
  #allocation1 [shape = 'u32[144,128]{1,0:T(1,128)}', space=vmem, size = 0x12000, scoped, tag = 'internal scratch']
  #allocation2 [shape = 'f32[16,128]{1,0:T(8,128)}', space=vmem, size = 0x2000, scoped, tag = 'scratch operand']
  %s0 = inlined_call_operand.vmem [shape: f32[16,128], index: 0, kind: input, shape index: {}]
  %s1 = inlined_call_operand.vmem [shape: f32[128,128], index: 1, kind: input, shape index: {}]
  %s2 = inlined_call_operand.vmem [shape: f32[1,128], index: 2, kind: input, shape index: {}]
  %s3 = inlined_call_operand.vmem [shape: f32[16,128], index: 3, kind: output, shape index: {}]
  %s4 = sld [smem:[#allocation0]]
  $region30: #{cross_attention_forward.5} parent=0
    _
  %s6 = ssub.s32 1, %s4
  %s7 = scalar_select 0, %s6, %s4
  // Predicated region
  $region2: #{cross_attention_forward.5} parent=0 // pred_check
    _
  $region3: #{cross_attention_forward.5} parent=0 // pred_check_branch
    %9 = sbr.rel (0) target = $region5
  $region4: #{cross_attention_forward.5} parent=0 // pred_region
    _
  $region5: #{cross_attention_forward.5} parent=0 // pred_fallthru
    _
  // Predicated region
  $region6: #{cross_attention_forward.5} parent=0 // pred_check
    _
  $region7: #{cross_attention_forward.5} parent=0 // pred_check_branch
    %11 = sbr.rel (0) target = $region9
  $region8: #{cross_attention_forward.5} parent=0 // pred_region
    _
  $region9: #{cross_attention_forward.5} parent=0 // pred_fallthru
    _
  // Predicated region
  $region10: #{cross_attention_forward.5} parent=0 // pred_check
    _
  $region11: #{cross_attention_forward.5} parent=0 // pred_check_branch
    %13 = sbr.rel (0) target = $region13
  $region12: #{cross_attention_forward.5} parent=0 // pred_region
    _
  $region13: #{cross_attention_forward.5} parent=0 // pred_fallthru
    _
  %p14 = scmp.eq.s32.totalorder 0, 0
  // Predicated region
  $region14: #{cross_attention_forward.5} parent=0 // pred_check
    %p15 = pneg %p14
  $region15: #{cross_attention_forward.5} parent=0 // pred_check_branch
    %17 = sbr.rel (%p15) target = $region17
  $region16: #{cross_attention_forward.5} parent=0 // pred_region
    %18 = vst [vmem:[#allocation2] sm:$0xff] 0.0
    %19 = vst [vmem:[#allocation2 + $0x8] sm:$0xff] 0.0
  $region17: #{cross_attention_forward.5} parent=0 // pred_fallthru
    _
  %v20 = vld [vmem:[#allocation2] sm:$0xff]
  %v21 = vld [vmem:[#allocation2 + $0x8] sm:$0xff]
  %v22 = vld [vmem:[%s0] sm:$0xff]
  %v23 = vld [vmem:[%s0 + $0x8] sm:$0xff]
  %v24 = vld [vmem:[%s1] sm:$0xff]
  %v25 = vld [vmem:[%s1 + $0x8] sm:$0xff]
  %v26 = vld [vmem:[%s1 + $0x10] sm:$0xff]
  %v27 = vld [vmem:[%s1 + $0x18] sm:$0xff]
  %v28 = vld [vmem:[%s1 + $0x20] sm:$0xff]
  %v29 = vld [vmem:[%s1 + $0x28] sm:$0xff]
  %v30 = vld [vmem:[%s1 + $0x30] sm:$0xff]
  %v31 = vld [vmem:[%s1 + $0x38] sm:$0xff]
  %v32 = vld [vmem:[%s1 + $0x40] sm:$0xff]
  %v33 = vld [vmem:[%s1 + $0x48] sm:$0xff]
  %v34 = vld [vmem:[%s1 + $0x50] sm:$0xff]
  %v35 = vld [vmem:[%s1 + $0x58] sm:$0xff]
  %v36 = vld [vmem:[%s1 + $0x60] sm:$0xff]
  %v37 = vld [vmem:[%s1 + $0x68] sm:$0xff]
  %v38 = vld [vmem:[%s1 + $0x70] sm:$0xff]
  %v39 = vld [vmem:[%s1 + $0x78] sm:$0xff]
  %40 = vmatprep.subr.mxu0 0.0
  %41 = vmatpush1.msra.mxu0 %v24
  %42 = vmatprep.subr.mxu0 0.0
  %43 = vmatpush1.msra.mxu0 %v25
  %44 = vmatprep.subr.mxu0 0.0
  %45 = vmatpush1.msra.mxu0 %v26
  %46 = vmatprep.subr.mxu0 0.0
  %47 = vmatpush1.msra.mxu0 %v27
  %48 = vmatprep.subr.mxu0 0.0
  %49 = vmatpush1.msra.mxu0 %v28
  %50 = vmatprep.subr.mxu0 0.0
  %51 = vmatpush1.msra.mxu0 %v29
  %52 = vmatprep.subr.mxu0 0.0
  %53 = vmatpush1.msra.mxu0 %v30
  %54 = vmatprep.subr.mxu0 0.0
  %55 = vmatpush1.msra.mxu0 %v31
  %56 = vmatprep.subr.mxu0 0.0
  %57 = vmatpush1.msra.mxu0 %v32
  %58 = vmatprep.subr.mxu0 0.0
  %59 = vmatpush1.msra.mxu0 %v33
  %60 = vmatprep.subr.mxu0 0.0
  %61 = vmatpush1.msra.mxu0 %v34
  %62 = vmatprep.subr.mxu0 0.0
  %63 = vmatpush1.msra.mxu0 %v35
  %64 = vmatprep.subr.mxu0 0.0
  %65 = vmatpush1.msra.mxu0 %v36
  %66 = vmatprep.subr.mxu0 0.0
  %67 = vmatpush1.msra.mxu0 %v37
  %68 = vmatprep.subr.mxu0 0.0
  %69 = vmatpush1.msra.mxu0 %v38
  %70 = vmatprep.subr.mxu0 0.0
  %71 = vmatpush1.msra.mxu0 %v39
  %72 = vmatprep.subr.mxu0 0.0
  %73 = vmatpush1.msra.mxu0 0.0
  %74 = vmatprep.subr.mxu0 0.0
  %75 = vmatpush1.msra.mxu0 0.0
  %76 = vmatprep.subr.mxu0 0.0
  %77 = vmatpush1.msra.mxu0 0.0
  %78 = vmatprep.subr.mxu0 0.0
  %79 = vmatpush1.msra.mxu0 0.0
  %80 = vmatprep.subr.mxu0 0.0
  %81 = vmatpush1.msra.mxu0 0.0
  %82 = vmatprep.subr.mxu0 0.0
  %83 = vmatpush1.msra.mxu0 0.0
  %84 = vmatprep.subr.mxu0 0.0
  %85 = vmatpush1.msra.mxu0 0.0
  %86 = vmatprep.subr.mxu0 0.0
  %87 = vmatpush1.msra.mxu0 0.0
  %88 = vmatprep.subr.mxu0 0.0
  %89 = vmatpush1.msra.mxu0 0.0
  %90 = vmatprep.subr.mxu0 0.0
  %91 = vmatpush1.msra.mxu0 0.0
  %92 = vmatprep.subr.mxu0 0.0
  %93 = vmatpush1.msra.mxu0 0.0
  %94 = vmatprep.subr.mxu0 0.0
  %95 = vmatpush1.msra.mxu0 0.0
  %96 = vmatprep.subr.mxu0 0.0
  %97 = vmatpush1.msra.mxu0 0.0
  %98 = vmatprep.subr.mxu0 0.0
  %99 = vmatpush1.msra.mxu0 0.0
  %100 = vmatprep.subr.mxu0 0.0
  %101 = vmatpush1.msra.mxu0 0.0
  %102 = vmatprep.subr.mxu0 0.0
  %103 = vmatpush1.msra.mxu0 0.0
  %104 = vmatprep.mubr.f32.mxu0 0.0
  %105 = vmatmul.mubr.f32.gmra.mrb[0].mxu0 %v22
  %v106 = vpop.f32.mrb[0].mxu0
  %v107 = vadd.f32 0.0, %v106
  %v108 = vpop.f32.mrb[0].mxu0
  %109 = vmatprep.mubr.f32.mxu0 0.0
  %110 = vmatmul.mubr.f32.gmra.mrb[0].mxu0 %v23
  %v111 = vpop.f32.mrb[0].mxu0
  %v112 = vadd.f32 0.0, %v111
  %v113 = vpop.f32.mrb[0].mxu0
  %114 = vdwg.mxu0
  %v115 = vadd.f32 %v20, %v107
  %v116 = vadd.f32 %v21, %v112
  %117 = vst [vmem:[#allocation2] sm:$0xff] %v115
  %118 = vst [vmem:[#allocation2 + $0x8] sm:$0xff] %v116
  // Predicated region
  $region18: #{cross_attention_forward.5} parent=0 // pred_check
    %p119 = pneg %p14
  $region19: #{cross_attention_forward.5} parent=0 // pred_check_branch
    %121 = sbr.rel (%p119) target = $region21
  $region20: #{cross_attention_forward.5} parent=0 // pred_region
    %v122 = vld [vmem:[#allocation2] sm:$0xff]
    %v123 = vld [vmem:[#allocation2 + $0x8] sm:$0xff]
    %v124 = vld [vmem:[%s2] sm:$0x1]
    %v126 = vlaneseq
    %v127 = vshrl.u32 %v126, 7
    %v128 = vsub.s32 0, %v127
    %v129 = vrot.slane %v124, %v128
    %v131 = vadd.f32 %v122, %v129
    %v132 = vadd.f32 %v123, %v129
    %133 = vst [vmem:[%s3] sm:$0xff] %v131
    %134 = vst [vmem:[%s3 + $0x8] sm:$0xff] %v132
  $region21: #{cross_attention_forward.5} parent=0 // pred_fallthru
    _
  // Predicated region
  $region22: #{cross_attention_forward.5} parent=0 // pred_check
    _
  $region23: #{cross_attention_forward.5} parent=0 // pred_check_branch
    %136 = sbr.rel (0) target = $region25
  $region24: #{cross_attention_forward.5} parent=0 // pred_region
    _
  $region25: #{cross_attention_forward.5} parent=0 // pred_fallthru
    _
  // Predicated region
  $region26: #{cross_attention_forward.5} parent=0 // pred_check
    _
  $region27: #{cross_attention_forward.5} parent=0 // pred_check_branch
    %138 = sbr.rel (0) target = $region29
  $region28: #{cross_attention_forward.5} parent=0 // pred_region
    _
  $region29: #{cross_attention_forward.5} parent=0 // pred_fallthru
    _

// kernel: cross_attention_forward.4
$region0: #{cross_attention_forward.4}
  #allocation0 [shape = 'u32[]', space=smem, size = 0x4, offset = 0x4, fixed_abs, tag = 'smem constant byte address 0x4 - core index']
  #allocation1 [shape = 'u32[144,128]{1,0:T(1,128)}', space=vmem, size = 0x12000, scoped, tag = 'internal scratch']
  #allocation2 [shape = 'f32[32,128]{1,0:T(8,128)}', space=vmem, size = 0x4000, scoped, tag = 'scratch operand']
  %s0 = inlined_call_operand.vmem [shape: f32[32,128], index: 0, kind: input, shape index: {}]
  %s1 = inlined_call_operand.vmem [shape: f32[128,128], index: 1, kind: input, shape index: {}]
  %s2 = inlined_call_operand.vmem [shape: f32[1,128], index: 2, kind: input, shape index: {}]
  %s3 = inlined_call_operand.vmem [shape: f32[32,128], index: 3, kind: output, shape index: {}]
  %s4 = sld [smem:[#allocation0]]
  $region30: #{cross_attention_forward.4} parent=0
    _
  %s6 = ssub.s32 1, %s4
  %s7 = scalar_select 0, %s6, %s4
  // Predicated region
  $region2: #{cross_attention_forward.4} parent=0 // pred_check
    _
  $region3: #{cross_attention_forward.4} parent=0 // pred_check_branch
    %9 = sbr.rel (0) target = $region5
  $region4: #{cross_attention_forward.4} parent=0 // pred_region
    _
  $region5: #{cross_attention_forward.4} parent=0 // pred_fallthru
    _
  // Predicated region
  $region6: #{cross_attention_forward.4} parent=0 // pred_check
    _
  $region7: #{cross_attention_forward.4} parent=0 // pred_check_branch
    %11 = sbr.rel (0) target = $region9
  $region8: #{cross_attention_forward.4} parent=0 // pred_region
    _
  $region9: #{cross_attention_forward.4} parent=0 // pred_fallthru
    _
  // Predicated region
  $region10: #{cross_attention_forward.4} parent=0 // pred_check
    _
  $region11: #{cross_attention_forward.4} parent=0 // pred_check_branch
    %13 = sbr.rel (0) target = $region13
  $region12: #{cross_attention_forward.4} parent=0 // pred_region
    _
  $region13: #{cross_attention_forward.4} parent=0 // pred_fallthru
    _
  %p14 = scmp.eq.s32.totalorder 0, 0
  // Predicated region
  $region14: #{cross_attention_forward.4} parent=0 // pred_check
    %p15 = pneg %p14
  $region15: #{cross_attention_forward.4} parent=0 // pred_check_branch
    %17 = sbr.rel (%p15) target = $region17
  $region16: #{cross_attention_forward.4} parent=0 // pred_region
    %18 = vst [vmem:[#allocation2] sm:$0xff] 0.0
    %19 = vst [vmem:[#allocation2 + $0x8] sm:$0xff] 0.0
    %20 = vst [vmem:[#allocation2 + $0x10] sm:$0xff] 0.0
    %21 = vst [vmem:[#allocation2 + $0x18] sm:$0xff] 0.0
  $region17: #{cross_attention_forward.4} parent=0 // pred_fallthru
    _
  %v22 = vld [vmem:[#allocation2] sm:$0xff]
  %v23 = vld [vmem:[#allocation2 + $0x8] sm:$0xff]
  %v24 = vld [vmem:[#allocation2 + $0x10] sm:$0xff]
  %v25 = vld [vmem:[#allocation2 + $0x18] sm:$0xff]
  %v26 = vld [vmem:[%s0] sm:$0xff]
  %v27 = vld [vmem:[%s0 + $0x8] sm:$0xff]
  %v28 = vld [vmem:[%s0 + $0x10] sm:$0xff]
  %v29 = vld [vmem:[%s0 + $0x18] sm:$0xff]
  %v30 = vld [vmem:[%s1] sm:$0xff]
  %v31 = vld [vmem:[%s1 + $0x8] sm:$0xff]
  %v32 = vld [vmem:[%s1 + $0x10] sm:$0xff]
  %v33 = vld [vmem:[%s1 + $0x18] sm:$0xff]
  %v34 = vld [vmem:[%s1 + $0x20] sm:$0xff]
  %v35 = vld [vmem:[%s1 + $0x28] sm:$0xff]
  %v36 = vld [vmem:[%s1 + $0x30] sm:$0xff]
  %v37 = vld [vmem:[%s1 + $0x38] sm:$0xff]
  %v38 = vld [vmem:[%s1 + $0x40] sm:$0xff]
  %v39 = vld [vmem:[%s1 + $0x48] sm:$0xff]
  %v40 = vld [vmem:[%s1 + $0x50] sm:$0xff]
  %v41 = vld [vmem:[%s1 + $0x58] sm:$0xff]
  %v42 = vld [vmem:[%s1 + $0x60] sm:$0xff]
  %v43 = vld [vmem:[%s1 + $0x68] sm:$0xff]
  %v44 = vld [vmem:[%s1 + $0x70] sm:$0xff]
  %v45 = vld [vmem:[%s1 + $0x78] sm:$0xff]
  %46 = vmatprep.subr.mxu0 0.0
  %47 = vmatpush1.msra.mxu0 %v30
  %48 = vmatprep.subr.mxu0 0.0
  %49 = vmatpush1.msra.mxu0 %v31
  %50 = vmatprep.subr.mxu0 0.0
  %51 = vmatpush1.msra.mxu0 %v32
  %52 = vmatprep.subr.mxu0 0.0
  %53 = vmatpush1.msra.mxu0 %v33
  %54 = vmatprep.subr.mxu0 0.0
  %55 = vmatpush1.msra.mxu0 %v34
  %56 = vmatprep.subr.mxu0 0.0
  %57 = vmatpush1.msra.mxu0 %v35
  %58 = vmatprep.subr.mxu0 0.0
  %59 = vmatpush1.msra.mxu0 %v36
  %60 = vmatprep.subr.mxu0 0.0
  %61 = vmatpush1.msra.mxu0 %v37
  %62 = vmatprep.subr.mxu0 0.0
  %63 = vmatpush1.msra.mxu0 %v38
  %64 = vmatprep.subr.mxu0 0.0
  %65 = vmatpush1.msra.mxu0 %v39
  %66 = vmatprep.subr.mxu0 0.0
  %67 = vmatpush1.msra.mxu0 %v40
  %68 = vmatprep.subr.mxu0 0.0
  %69 = vmatpush1.msra.mxu0 %v41
  %70 = vmatprep.subr.mxu0 0.0
  %71 = vmatpush1.msra.mxu0 %v42
  %72 = vmatprep.subr.mxu0 0.0
  %73 = vmatpush1.msra.mxu0 %v43
  %74 = vmatprep.subr.mxu0 0.0
  %75 = vmatpush1.msra.mxu0 %v44
  %76 = vmatprep.subr.mxu0 0.0
  %77 = vmatpush1.msra.mxu0 %v45
  %78 = vmatprep.subr.mxu0 0.0
  %79 = vmatpush1.msra.mxu0 0.0
  %80 = vmatprep.subr.mxu0 0.0
  %81 = vmatpush1.msra.mxu0 0.0
  %82 = vmatprep.subr.mxu0 0.0
  %83 = vmatpush1.msra.mxu0 0.0
  %84 = vmatprep.subr.mxu0 0.0
  %85 = vmatpush1.msra.mxu0 0.0
  %86 = vmatprep.subr.mxu0 0.0
  %87 = vmatpush1.msra.mxu0 0.0
  %88 = vmatprep.subr.mxu0 0.0
  %89 = vmatpush1.msra.mxu0 0.0
  %90 = vmatprep.subr.mxu0 0.0
  %91 = vmatpush1.msra.mxu0 0.0
  %92 = vmatprep.subr.mxu0 0.0
  %93 = vmatpush1.msra.mxu0 0.0
  %94 = vmatprep.subr.mxu0 0.0
  %95 = vmatpush1.msra.mxu0 0.0
  %96 = vmatprep.subr.mxu0 0.0
  %97 = vmatpush1.msra.mxu0 0.0
  %98 = vmatprep.subr.mxu0 0.0
  %99 = vmatpush1.msra.mxu0 0.0
  %100 = vmatprep.subr.mxu0 0.0
  %101 = vmatpush1.msra.mxu0 0.0
  %102 = vmatprep.subr.mxu0 0.0
  %103 = vmatpush1.msra.mxu0 0.0
  %104 = vmatprep.subr.mxu0 0.0
  %105 = vmatpush1.msra.mxu0 0.0
  %106 = vmatprep.subr.mxu0 0.0
  %107 = vmatpush1.msra.mxu0 0.0
  %108 = vmatprep.subr.mxu0 0.0
  %109 = vmatpush1.msra.mxu0 0.0
  %110 = vmatprep.mubr.f32.mxu0 0.0
  %111 = vmatmul.mubr.f32.gmra.mrb[0].mxu0 %v26
  %v112 = vpop.f32.mrb[0].mxu0
  %v113 = vadd.f32 0.0, %v112
  %v114 = vpop.f32.mrb[0].mxu0
  %115 = vmatprep.mubr.f32.mxu0 0.0
  %116 = vmatmul.mubr.f32.gmra.mrb[0].mxu0 %v27
  %v117 = vpop.f32.mrb[0].mxu0
  %v118 = vadd.f32 0.0, %v117
  %v119 = vpop.f32.mrb[0].mxu0
  %120 = vmatprep.mubr.f32.mxu0 0.0
  %121 = vmatmul.mubr.f32.gmra.mrb[0].mxu0 %v28
  %v122 = vpop.f32.mrb[0].mxu0
  %v123 = vadd.f32 0.0, %v122
  %v124 = vpop.f32.mrb[0].mxu0
  %125 = vmatprep.mubr.f32.mxu0 0.0
  %126 = vmatmul.mubr.f32.gmra.mrb[0].mxu0 %v29
  %v127 = vpop.f32.mrb[0].mxu0
  %v128 = vadd.f32 0.0, %v127
  %v129 = vpop.f32.mrb[0].mxu0
  %130 = vdwg.mxu0
  %v131 = vadd.f32 %v22, %v113
  %v132 = vadd.f32 %v23, %v118
  %v133 = vadd.f32 %v24, %v123
  %v134 = vadd.f32 %v25, %v128
  %135 = vst [vmem:[#allocation2] sm:$0xff] %v131
  %136 = vst [vmem:[#allocation2 + $0x8] sm:$0xff] %v132
  %137 = vst [vmem:[#allocation2 + $0x10] sm:$0xff] %v133
  %138 = vst [vmem:[#allocation2 + $0x18] sm:$0xff] %v134
  // Predicated region
  $region18: #{cross_attention_forward.4} parent=0 // pred_check
    %p139 = pneg %p14
  $region19: #{cross_attention_forward.4} parent=0 // pred_check_branch
    %141 = sbr.rel (%p139) target = $region21
  $region20: #{cross_attention_forward.4} parent=0 // pred_region
    %v142 = vld [vmem:[#allocation2] sm:$0xff]
    %v143 = vld [vmem:[#allocation2 + $0x8] sm:$0xff]
    %v144 = vld [vmem:[#allocation2 + $0x10] sm:$0xff]
    %v145 = vld [vmem:[#allocation2 + $0x18] sm:$0xff]
    %v146 = vld [vmem:[%s2] sm:$0x1]
    %v148 = vlaneseq
    %v149 = vshrl.u32 %v148, 7
    %v150 = vsub.s32 0, %v149
    %v151 = vrot.slane %v146, %v150
    %v153 = vadd.f32 %v142, %v151
    %v154 = vadd.f32 %v143, %v151
    %v155 = vadd.f32 %v144, %v151
    %v156 = vadd.f32 %v145, %v151
    %157 = vst [vmem:[%s3] sm:$0xff] %v153
    %158 = vst [vmem:[%s3 + $0x8] sm:$0xff] %v154
    %159 = vst [vmem:[%s3 + $0x10] sm:$0xff] %v155
    %160 = vst [vmem:[%s3 + $0x18] sm:$0xff] %v156
  $region21: #{cross_attention_forward.4} parent=0 // pred_fallthru
    _
  // Predicated region
  $region22: #{cross_attention_forward.4} parent=0 // pred_check
    _
  $region23: #{cross_attention_forward.4} parent=0 // pred_check_branch
    %162 = sbr.rel (0) target = $region25
  $region24: #{cross_attention_forward.4} parent=0 // pred_region
    _
  $region25: #{cross_attention_forward.4} parent=0 // pred_fallthru
    _
  // Predicated region
  $region26: #{cross_attention_forward.4} parent=0 // pred_check
    _
  $region27: #{cross_attention_forward.4} parent=0 // pred_check_branch
    %164 = sbr.rel (0) target = $region29
  $region28: #{cross_attention_forward.4} parent=0 // pred_region
    _
  $region29: #{cross_attention_forward.4} parent=0 // pred_fallthru
    _

// kernel: cross_attention_forward.7
$region0: #{cross_attention_forward.7}
  #allocation0 [shape = 'u32[]', space=smem, size = 0x4, offset = 0x4, fixed_abs, tag = 'smem constant byte address 0x4 - core index']
  #allocation1 [shape = 'u32[144,128]{1,0:T(1,128)}', space=vmem, size = 0x12000, scoped, tag = 'internal scratch']
  #allocation2 [shape = 'f32[32,128]{1,0:T(8,128)}', space=vmem, size = 0x4000, scoped, tag = 'scratch operand']
  %s0 = inlined_call_operand.vmem [shape: f32[32,128], index: 0, kind: input, shape index: {}]
  %s1 = inlined_call_operand.vmem [shape: f32[128,128], index: 1, kind: input, shape index: {}]
  %s2 = inlined_call_operand.vmem [shape: f32[1,128], index: 2, kind: input, shape index: {}]
  %s3 = inlined_call_operand.hbm [shape: f32[32,128], index: 3, kind: output, shape index: {}]
  %s4 = sld [smem:[#allocation0]]
  $region30: #{cross_attention_forward.7} parent=0
    _
  %s6 = ssub.s32 1, %s4
  %s7 = scalar_select 0, %s6, %s4
  $region1: #{cross_attention_forward.7} parent=0
    #allocation3 [shape = 'u8[16384]{0}', space=vmem, size = 0x4000, scoped, tag = 'output window, operand 0, single buffered']
    #allocation4 [shape = 's32[1]{0}', space=sflag, size = 0x4, scoped, tag = 'scoped memory for cross_attention_forward.7']
    %8 = vsyncpa [#allocation4], 0
    // Predicated region
    $region2: #{cross_attention_forward.7} parent=1 // pred_check
      _
    $region3: #{cross_attention_forward.7} parent=1 // pred_check_branch
      %10 = sbr.rel (0) target = $region5
    $region4: #{cross_attention_forward.7} parent=1 // pred_region
      _
    $region5: #{cross_attention_forward.7} parent=1 // pred_fallthru
      _
    // Predicated region
    $region6: #{cross_attention_forward.7} parent=1 // pred_check
      _
    $region7: #{cross_attention_forward.7} parent=1 // pred_check_branch
      %12 = sbr.rel (0) target = $region9
    $region8: #{cross_attention_forward.7} parent=1 // pred_region
      _
    $region9: #{cross_attention_forward.7} parent=1 // pred_fallthru
      _
    // Predicated region
    $region10: #{cross_attention_forward.7} parent=1 // pred_check
      _
    $region11: #{cross_attention_forward.7} parent=1 // pred_check_branch
      %14 = sbr.rel (0) target = $region13
    $region12: #{cross_attention_forward.7} parent=1 // pred_region
      _
    $region13: #{cross_attention_forward.7} parent=1 // pred_fallthru
      _
    %p15 = scmp.eq.s32.totalorder 0, 0
    // Predicated region
    $region14: #{cross_attention_forward.7} parent=1 // pred_check
      %p16 = pneg %p15
    $region15: #{cross_attention_forward.7} parent=1 // pred_check_branch
      %18 = sbr.rel (%p16) target = $region17
    $region16: #{cross_attention_forward.7} parent=1 // pred_region
      %19 = vst [vmem:[#allocation2] sm:$0xff] 0.0
      %20 = vst [vmem:[#allocation2 + $0x8] sm:$0xff] 0.0
      %21 = vst [vmem:[#allocation2 + $0x10] sm:$0xff] 0.0
      %22 = vst [vmem:[#allocation2 + $0x18] sm:$0xff] 0.0
    $region17: #{cross_attention_forward.7} parent=1 // pred_fallthru
      _
    %v23 = vld [vmem:[#allocation2] sm:$0xff]
    %v24 = vld [vmem:[#allocation2 + $0x8] sm:$0xff]
    %v25 = vld [vmem:[#allocation2 + $0x10] sm:$0xff]
    %v26 = vld [vmem:[#allocation2 + $0x18] sm:$0xff]
    %v27 = vld [vmem:[%s0] sm:$0xff]
    %v28 = vld [vmem:[%s0 + $0x8] sm:$0xff]
    %v29 = vld [vmem:[%s0 + $0x10] sm:$0xff]
    %v30 = vld [vmem:[%s0 + $0x18] sm:$0xff]
    %v31 = vld [vmem:[%s1] sm:$0xff]
    %v32 = vld [vmem:[%s1 + $0x8] sm:$0xff]
    %v33 = vld [vmem:[%s1 + $0x10] sm:$0xff]
    %v34 = vld [vmem:[%s1 + $0x18] sm:$0xff]
    %v35 = vld [vmem:[%s1 + $0x20] sm:$0xff]
    %v36 = vld [vmem:[%s1 + $0x28] sm:$0xff]
    %v37 = vld [vmem:[%s1 + $0x30] sm:$0xff]
    %v38 = vld [vmem:[%s1 + $0x38] sm:$0xff]
    %v39 = vld [vmem:[%s1 + $0x40] sm:$0xff]
    %v40 = vld [vmem:[%s1 + $0x48] sm:$0xff]
    %v41 = vld [vmem:[%s1 + $0x50] sm:$0xff]
    %v42 = vld [vmem:[%s1 + $0x58] sm:$0xff]
    %v43 = vld [vmem:[%s1 + $0x60] sm:$0xff]
    %v44 = vld [vmem:[%s1 + $0x68] sm:$0xff]
    %v45 = vld [vmem:[%s1 + $0x70] sm:$0xff]
    %v46 = vld [vmem:[%s1 + $0x78] sm:$0xff]
    %47 = vmatprep.subr.mxu0 0.0
    %48 = vmatpush1.msra.mxu0 %v31
    %49 = vmatprep.subr.mxu0 0.0
    %50 = vmatpush1.msra.mxu0 %v32
    %51 = vmatprep.subr.mxu0 0.0
    %52 = vmatpush1.msra.mxu0 %v33
    %53 = vmatprep.subr.mxu0 0.0
    %54 = vmatpush1.msra.mxu0 %v34
    %55 = vmatprep.subr.mxu0 0.0
    %56 = vmatpush1.msra.mxu0 %v35
    %57 = vmatprep.subr.mxu0 0.0
    %58 = vmatpush1.msra.mxu0 %v36
    %59 = vmatprep.subr.mxu0 0.0
    %60 = vmatpush1.msra.mxu0 %v37
    %61 = vmatprep.subr.mxu0 0.0
    %62 = vmatpush1.msra.mxu0 %v38
    %63 = vmatprep.subr.mxu0 0.0
    %64 = vmatpush1.msra.mxu0 %v39
    %65 = vmatprep.subr.mxu0 0.0
    %66 = vmatpush1.msra.mxu0 %v40
    %67 = vmatprep.subr.mxu0 0.0
    %68 = vmatpush1.msra.mxu0 %v41
    %69 = vmatprep.subr.mxu0 0.0
    %70 = vmatpush1.msra.mxu0 %v42
    %71 = vmatprep.subr.mxu0 0.0
    %72 = vmatpush1.msra.mxu0 %v43
    %73 = vmatprep.subr.mxu0 0.0
    %74 = vmatpush1.msra.mxu0 %v44
    %75 = vmatprep.subr.mxu0 0.0
    %76 = vmatpush1.msra.mxu0 %v45
    %77 = vmatprep.subr.mxu0 0.0
    %78 = vmatpush1.msra.mxu0 %v46
    %79 = vmatprep.subr.mxu0 0.0
    %80 = vmatpush1.msra.mxu0 0.0
    %81 = vmatprep.subr.mxu0 0.0
    %82 = vmatpush1.msra.mxu0 0.0
    %83 = vmatprep.subr.mxu0 0.0
    %84 = vmatpush1.msra.mxu0 0.0
    %85 = vmatprep.subr.mxu0 0.0
    %86 = vmatpush1.msra.mxu0 0.0
    %87 = vmatprep.subr.mxu0 0.0
    %88 = vmatpush1.msra.mxu0 0.0
    %89 = vmatprep.subr.mxu0 0.0
    %90 = vmatpush1.msra.mxu0 0.0
    %91 = vmatprep.subr.mxu0 0.0
    %92 = vmatpush1.msra.mxu0 0.0
    %93 = vmatprep.subr.mxu0 0.0
    %94 = vmatpush1.msra.mxu0 0.0
    %95 = vmatprep.subr.mxu0 0.0
    %96 = vmatpush1.msra.mxu0 0.0
    %97 = vmatprep.subr.mxu0 0.0
    %98 = vmatpush1.msra.mxu0 0.0
    %99 = vmatprep.subr.mxu0 0.0
    %100 = vmatpush1.msra.mxu0 0.0
    %101 = vmatprep.subr.mxu0 0.0
    %102 = vmatpush1.msra.mxu0 0.0
    %103 = vmatprep.subr.mxu0 0.0
    %104 = vmatpush1.msra.mxu0 0.0
    %105 = vmatprep.subr.mxu0 0.0
    %106 = vmatpush1.msra.mxu0 0.0
    %107 = vmatprep.subr.mxu0 0.0
    %108 = vmatpush1.msra.mxu0 0.0
    %109 = vmatprep.subr.mxu0 0.0
    %110 = vmatpush1.msra.mxu0 0.0
    %111 = vmatprep.mubr.f32.mxu0 0.0
    %112 = vmatmul.mubr.f32.gmra.mrb[0].mxu0 %v27
    %v113 = vpop.f32.mrb[0].mxu0
    %v114 = vadd.f32 0.0, %v113
    %v115 = vpop.f32.mrb[0].mxu0
    %116 = vmatprep.mubr.f32.mxu0 0.0
    %117 = vmatmul.mubr.f32.gmra.mrb[0].mxu0 %v28
    %v118 = vpop.f32.mrb[0].mxu0
    %v119 = vadd.f32 0.0, %v118
    %v120 = vpop.f32.mrb[0].mxu0
    %121 = vmatprep.mubr.f32.mxu0 0.0
    %122 = vmatmul.mubr.f32.gmra.mrb[0].mxu0 %v29
    %v123 = vpop.f32.mrb[0].mxu0
    %v124 = vadd.f32 0.0, %v123
    %v125 = vpop.f32.mrb[0].mxu0
    %126 = vmatprep.mubr.f32.mxu0 0.0
    %127 = vmatmul.mubr.f32.gmra.mrb[0].mxu0 %v30
    %v128 = vpop.f32.mrb[0].mxu0
    %v129 = vadd.f32 0.0, %v128
    %v130 = vpop.f32.mrb[0].mxu0
    %131 = vdwg.mxu0
    %v132 = vadd.f32 %v23, %v114
    %v133 = vadd.f32 %v24, %v119
    %v134 = vadd.f32 %v25, %v124
    %v135 = vadd.f32 %v26, %v129
    %136 = vst [vmem:[#allocation2] sm:$0xff] %v132
    %137 = vst [vmem:[#allocation2 + $0x8] sm:$0xff] %v133
    %138 = vst [vmem:[#allocation2 + $0x10] sm:$0xff] %v134
    %139 = vst [vmem:[#allocation2 + $0x18] sm:$0xff] %v135
    // Predicated region
    $region18: #{cross_attention_forward.7} parent=1 // pred_check
      %p140 = pneg %p15
    $region19: #{cross_attention_forward.7} parent=1 // pred_check_branch
      %142 = sbr.rel (%p140) target = $region21
    $region20: #{cross_attention_forward.7} parent=1 // pred_region
      %v143 = vld [vmem:[#allocation2] sm:$0xff]
      %v144 = vld [vmem:[#allocation2 + $0x8] sm:$0xff]
      %v145 = vld [vmem:[#allocation2 + $0x10] sm:$0xff]
      %v146 = vld [vmem:[#allocation2 + $0x18] sm:$0xff]
      %v147 = vld [vmem:[%s2] sm:$0x1]
      %v149 = vlaneseq
      %v150 = vshrl.u32 %v149, 7
      %v151 = vsub.s32 0, %v150
      %v152 = vrot.slane %v147, %v151
      %v154 = vadd.f32 %v143, %v152
      %v155 = vadd.f32 %v144, %v152
      %v156 = vadd.f32 %v145, %v152
      %v157 = vadd.f32 %v146, %v152
      %158 = vst [vmem:[#allocation3] sm:$0xff] %v154
      %159 = vst [vmem:[#allocation3 + $0x8] sm:$0xff] %v155
      %160 = vst [vmem:[#allocation3 + $0x10] sm:$0xff] %v156
      %161 = vst [vmem:[#allocation3 + $0x18] sm:$0xff] %v157
    $region21: #{cross_attention_forward.7} parent=1 // pred_fallthru
      _
    // Predicated region
    $region22: #{cross_attention_forward.7} parent=1 // pred_check
      _
    $region23: #{cross_attention_forward.7} parent=1 // pred_check_branch
      %163 = sbr.rel (0) target = $region25
    $region24: #{cross_attention_forward.7} parent=1 // pred_region
      %s165 = ssub.s32 512, 512
      %166 = vsyncadd [#allocation4], %s165
      %s167 = sshll.u32 [#allocation3], 4
      %s168 = int_to_ptr.vmem [resolvable:$true] %s167
      %173 = dma.vmem_to_hbm [thread:$0]  %s168, 512, %s3, [#allocation4], 128, 128, 8
    $region25: #{cross_attention_forward.7} parent=1 // pred_fallthru
      _
    // Predicated region
    $region26: #{cross_attention_forward.7} parent=1 // pred_check
      _
    $region27: #{cross_attention_forward.7} parent=1 // pred_check_branch
      %175 = sbr.rel (0) target = $region29
    $region28: #{cross_attention_forward.7} parent=1 // pred_region
      %176 = dma.done [#allocation4], 512
    $region29: #{cross_attention_forward.7} parent=1 // pred_fallthru
      _
    %177 = vsyncpa [#allocation4], 1

// kernel: cross_attention_forward.6
$region0: #{cross_attention_forward.6}
  #allocation0 [shape = 'u32[]', space=smem, size = 0x4, offset = 0x4, fixed_abs, tag = 'smem constant byte address 0x4 - core index']
  #allocation1 [shape = 'u32[144,128]{1,0:T(1,128)}', space=vmem, size = 0x12000, scoped, tag = 'internal scratch']
  %s0 = inlined_call_operand.vmem [shape: f32[2,16,32], index: 0, kind: input, shape index: {}]
  %s1 = inlined_call_operand.vmem [shape: f32[2,8,64], index: 1, kind: input, shape index: {}]
  %s2 = inlined_call_operand.vmem [shape: f32[2,16,32], index: 2, kind: output, shape index: {}]
  %s3 = sld [smem:[#allocation0]]
  $region41: #{cross_attention_forward.6} parent=0
    _
  %s5 = ssub.s32 1, %s3
  %s6 = scalar_select 0, %s5, %s3
  loop: start=0, step=1, limit=4
  $region2: #{cross_attention_forward.6} parent=0 // loop_pre_header
    _
  $region3: #{cross_attention_forward.6} parent=0 // loop_header
    %s8 = sphi 0, %s12
    %p9 = scmp.ge.s32.totalorder %s8, 4
    %s15 = sphi 0, %s27
    %s16 = sphi 0, %s23
    %s17 = sphi 0, %s15
    %s18 = sphi 0, %s16
    %s19 = sphi 0, %s17
    %s20 = sphi 0, %s18
    %s32 = sphi 0, %s34
    %s35 = sphi 0, %s32
    %s36 = sphi 0, %s35
    %s52 = sphi 0, %s36
    %s58 = sphi 0, %s60
    %s61 = sphi 0, %s58
    %s62 = sphi 0, %s61
    %s78 = sphi 0, %s62
    %s86 = sphi 0, %s88
    %s89 = sphi 0, %s86
    %s90 = sphi 0, %s89
    %s106 = sphi 0, %s90
  $region4: #{cross_attention_forward.6} parent=0 // loop_header_branch
    %11 = sbr.rel (%p9) target = $region8
  $region5: #{cross_attention_forward.6} parent=0 // loop_body
    %s13 = ssub.s32 %s8, 1
    %s14 = ssub.s32 %s8, 2
    %s21 = sadd.s32 1, %s16
    %p22 = scmp.ge.s32.totalorder %s21, 1
    %s23 = scalar_select %p22, 0, %s21
    %s24 = sadd.s32 1, %s15
    %s25 = scalar_select %p22, %s24, %s15
    %p26 = scmp.ge.s32.totalorder %s25, 2
    %s27 = scalar_select %p26, 0, %s25
    %s28 = ssub.s32 %s15, %s27
    %s29 = ssub.s32 %s16, %s23
    %s30 = sor.u32 %s28, %s29
    %p31 = scmp.eq.s32.totalorder %s30, 0
    %s33 = sadd.s32 %s32, 1
    %s34 = scalar_select %p31, %s32, %s33
    %p37 = pneg %p31
    %p38 = scmp.eq.s32.totalorder %s8, 1
    %p39 = por %p37, %p38
    %p40 = scmp.ne.s32.totalorder %s32, %s35
    %p41 = scmp.eq.s32.totalorder %s8, 0
    %p42 = por %p40, %p41
    %p43 = scmp.ne.s32.totalorder %s32, %s35
    %p44 = scmp.eq.s32.totalorder %s13, 1
    %p45 = por %p43, %p44
    %p46 = scmp.ne.s32.totalorder %s35, %s36
    %p47 = scmp.eq.s32.totalorder %s13, 0
    %p48 = por %p46, %p47
    %p49 = scmp.ne.s32.totalorder %s35, %s36
    %p50 = scmp.eq.s32.totalorder %s14, 1
    %p51 = por %p49, %p50
    %p53 = scmp.ne.s32.totalorder %s36, %s52
    %p54 = scmp.eq.s32.totalorder %s14, 0
    %p55 = por %p53, %p54
    %s56 = ssub.s32 %s15, %s27
    %p57 = scmp.eq.s32.totalorder %s56, 0
    %s59 = sadd.s32 %s58, 1
    %s60 = scalar_select %p57, %s58, %s59
    %p63 = pneg %p57
    %p64 = scmp.eq.s32.totalorder %s8, 1
    %p65 = por %p63, %p64
    %p66 = scmp.ne.s32.totalorder %s58, %s61
    %p67 = scmp.eq.s32.totalorder %s8, 0
    %p68 = por %p66, %p67
    %p69 = scmp.ne.s32.totalorder %s58, %s61
    %p70 = scmp.eq.s32.totalorder %s13, 1
    %p71 = por %p69, %p70
    %p72 = scmp.ne.s32.totalorder %s61, %s62
    %p73 = scmp.eq.s32.totalorder %s13, 0
    %p74 = por %p72, %p73
    %p75 = scmp.ne.s32.totalorder %s61, %s62
    %p76 = scmp.eq.s32.totalorder %s14, 1
    %p77 = por %p75, %p76
    %p79 = scmp.ne.s32.totalorder %s62, %s78
    %p80 = scmp.eq.s32.totalorder %s14, 0
    %p81 = por %p79, %p80
    %s82 = ssub.s32 %s15, %s27
    %s83 = ssub.s32 %s16, %s23
    %s84 = sor.u32 %s82, %s83
    %p85 = scmp.eq.s32.totalorder %s84, 0
    %s87 = sadd.s32 %s86, 1
    %s88 = scalar_select %p85, %s86, %s87
    %p91 = pneg %p85
    %p92 = scmp.eq.s32.totalorder %s8, 1
    %p93 = por %p91, %p92
    %p94 = scmp.ne.s32.totalorder %s86, %s89
    %p95 = scmp.eq.s32.totalorder %s8, 0
    %p96 = por %p94, %p95
    %p97 = scmp.ne.s32.totalorder %s86, %s89
    %p98 = scmp.eq.s32.totalorder %s13, 1
    %p99 = por %p97, %p98
    %p100 = scmp.ne.s32.totalorder %s89, %s90
    %p101 = scmp.eq.s32.totalorder %s13, 0
    %p102 = por %p100, %p101
    %p103 = scmp.ne.s32.totalorder %s89, %s90
    %p104 = scmp.eq.s32.totalorder %s14, 1
    %p105 = por %p103, %p104
    %p107 = scmp.ne.s32.totalorder %s90, %s106
    %p108 = scmp.eq.s32.totalorder %s14, 0
    %p109 = por %p107, %p108
    %p110 = scmp.le.s32.totalorder 1, %s8
    %p111 = scmp.lt.s32.totalorder %s8, 3
    %p112 = pnand %p110, %p111
    %p113 = pneg %p112
    // Predicated region
    $region9: #{cross_attention_forward.6} parent=5 // pred_check
      _
    $region10: #{cross_attention_forward.6} parent=5 // pred_check_branch
      %115 = sbr.rel (%p112) target = $region12
    $region11: #{cross_attention_forward.6} parent=5 // pred_region
      %s116 = ssub.s32 %s8, 1
    $region12: #{cross_attention_forward.6} parent=5 // pred_fallthru
      _
    %p117 = scmp.lt.s32.totalorder %s8, 2
    // Predicated region
    $region13: #{cross_attention_forward.6} parent=5 // pred_check
      %p118 = pneg %p117
    $region14: #{cross_attention_forward.6} parent=5 // pred_check_branch
      %120 = sbr.rel (%p118) target = $region16
    $region15: #{cross_attention_forward.6} parent=5 // pred_region
      // Predicated region
      $region17: #{cross_attention_forward.6} parent=15 // pred_check
        %p121 = pneg %p42
      $region18: #{cross_attention_forward.6} parent=15 // pred_check_branch
        %123 = sbr.rel (%p121) target = $region20
      $region19: #{cross_attention_forward.6} parent=15 // pred_region
        %s124 = smul.u32 2, %s16
        %p125 = scmp.lt.s32.totalorder %s15, 1
        %s126 = scalar_select %p125, %s15, 1
        %p127 = scmp.lt.s32.totalorder %s124, 1
        %s128 = scalar_select %p127, %s124, 1
        %s129 = smul.addr %s126, 2
        %s130 = sadd.s32 %s128, %s129
        %s131 = smul.addr %s130, 8
        %s132 = scalar_lea.vmem %s0, %s131
        %s133 = smul.u32 2, %s16
      $region20: #{cross_attention_forward.6} parent=15 // pred_fallthru
        _
      // Predicated region
      $region21: #{cross_attention_forward.6} parent=15 // pred_check
        %p134 = pneg %p68
      $region22: #{cross_attention_forward.6} parent=15 // pred_check_branch
        %136 = sbr.rel (%p134) target = $region24
      $region23: #{cross_attention_forward.6} parent=15 // pred_region
        %p137 = scmp.lt.s32.totalorder %s15, 1
        %s138 = scalar_select %p137, %s15, 1
        %s139 = smul.addr %s138, 8
        %s140 = scalar_lea.vmem %s1, %s139
      $region24: #{cross_attention_forward.6} parent=15 // pred_fallthru
        _
    $region16: #{cross_attention_forward.6} parent=5 // pred_fallthru
      _
    %p141 = scmp.le.s32.totalorder 1, %s8
    %p142 = scmp.lt.s32.totalorder %s8, 3
    %p143 = pnand %p141, %p142
    %p144 = pneg %p143
    // Predicated region
    $region25: #{cross_attention_forward.6} parent=5 // pred_check
      _
    $region26: #{cross_attention_forward.6} parent=5 // pred_check_branch
      %146 = sbr.rel (%p143) target = $region28
    $region27: #{cross_attention_forward.6} parent=5 // pred_region
      %s147 = ssub.s32 %s8, 1
      %s148 = smul.u32 2, %s18
      %p149 = scmp.lt.s32.totalorder %s17, 1
      %s150 = scalar_select %p149, %s17, 1
      %p151 = scmp.lt.s32.totalorder %s148, 1
      %s152 = scalar_select %p151, %s148, 1
      %s153 = smul.addr %s150, 2
      %s154 = sadd.s32 %s152, %s153
      %s155 = smul.addr %s154, 8
      %s156 = scalar_lea.vmem %s0, %s155
      %p157 = pneg %p48
      %p158 = pneg %p45
      %p159 = scmp.lt.s32.totalorder %s17, 1
      %s160 = scalar_select %p159, %s17, 1
      %s161 = smul.addr %s160, 8
      %s162 = scalar_lea.vmem %s1, %s161
      %p163 = pneg %p74
      %p164 = pneg %p71
      %p165 = pneg %p102
      %p166 = pneg %p99
      %s167 = smul.u32 2, %s18
      %p168 = scmp.lt.s32.totalorder %s17, 1
      %s169 = scalar_select %p168, %s17, 1
      %p170 = scmp.lt.s32.totalorder %s167, 1
      %s171 = scalar_select %p170, %s167, 1
      %s172 = smul.addr %s169, 2
      %s173 = sadd.s32 %s171, %s172
      %s174 = smul.addr %s173, 8
      %s175 = scalar_lea.vmem %s2, %s174
      %s176 = smul.u32 2, %s18
      %p177 = scmp.lt.s32.totalorder %s17, 1
      %s178 = scalar_select %p177, %s17, 1
      %p179 = scmp.lt.s32.totalorder %s176, 1
      %s180 = scalar_select %p179, %s176, 1
      %s181 = smul.addr %s178, 2
      %s182 = sadd.s32 %s180, %s181
      %s183 = smul.addr %s182, 8
      %s184 = scalar_lea.vmem %s0, %s183
      %s185 = smul.u32 2, %s18
      %p186 = scmp.lt.s32.totalorder %s17, 1
      %s187 = scalar_select %p186, %s17, 1
      %s188 = smul.addr %s187, 8
      %s189 = scalar_lea.vmem %s1, %s188
      %s190 = smul.u32 2, %s18
      %p191 = scmp.lt.s32.totalorder %s17, 1
      %s192 = scalar_select %p191, %s17, 1
      %p193 = scmp.lt.s32.totalorder %s190, 1
      %s194 = scalar_select %p193, %s190, 1
      %s195 = smul.addr %s192, 2
      %s196 = sadd.s32 %s194, %s195
      %s197 = smul.addr %s196, 8
      %s198 = scalar_lea.vmem %s2, %s197
      %s199 = smul.u32 2, %s18
      %v200 = vld [vmem:[%s184] sm:$0xff]
      %v201 = vld [vmem:[%s184 + $0x8] sm:$0xff]
      %v202 = vld [vmem:[%s189] sm:$0xff]
      %205 = vrot.lane.b32.xlu0 %v200, 120
      %v206 = vpop.permute.xlu0 %205
      %207 = vrot.lane.b32.xlu0 %v201, 120
      %v208 = vpop.permute.xlu0 %207
      %211 = vrot.lane.b32.xlu0 %v200, 112
      %v212 = vpop.permute.xlu0 %211
      %213 = vrot.lane.b32.xlu0 %v201, 112
      %v214 = vpop.permute.xlu0 %213
      %217 = vrot.lane.b32.xlu0 %v200, 104
      %v218 = vpop.permute.xlu0 %217
      %219 = vrot.lane.b32.xlu0 %v201, 104
      %v220 = vpop.permute.xlu0 %219
      %v223 = vcombine.low %v200, %v212
      %v224 = vcombine.high %v200, %v212
      %v226 = vunpack.c.l.s4 1983009808
      %v227 = vunpack.c.0.s8 %v226
      %v228 = vlaneseq
      %v229 = vshrl.u32 %v228, 7
      %v230 = vsub.s32 %v227, %v229
      %v231 = vrot.slane %v223, %v230
      %v233 = vunpack.c.l.s4 1983009808
      %v234 = vunpack.c.0.s8 %v233
      %v235 = vlaneseq
      %v236 = vshrl.u32 %v235, 7
      %v237 = vsub.s32 %v234, %v236
      %v238 = vrot.slane %v224, %v237
      %v239 = vcombine.low %v206, %v218
      %v240 = vcombine.high %v206, %v218
      %v242 = vunpack.c.l.s4 1983009808
      %v243 = vunpack.c.0.s8 %v242
      %v244 = vlaneseq
      %v245 = vshrl.u32 %v244, 7
      %v246 = vsub.s32 %v243, %v245
      %v247 = vrot.slane %v239, %v246
      %v249 = vunpack.c.l.s4 1983009808
      %v250 = vunpack.c.0.s8 %v249
      %v251 = vlaneseq
      %v252 = vshrl.u32 %v251, 7
      %v253 = vsub.s32 %v250, %v252
      %v254 = vrot.slane %v240, %v253
      %v255 = vcombine.low %v231, %v247
      %v256 = vcombine.high %v231, %v247
      %v258 = vunpack.c.l.s4 1934713408
      %v259 = vunpack.c.0.s8 %v258
      %v260 = vlaneseq
      %v261 = vshrl.u32 %v260, 7
      %v262 = vsub.s32 %v259, %v261
      %v263 = vrot.slane %v255, %v262
      %v265 = vunpack.c.l.s4 1934713408
      %v266 = vunpack.c.0.s8 %v265
      %v267 = vlaneseq
      %v268 = vshrl.u32 %v267, 7
      %v269 = vsub.s32 %v266, %v268
      %v270 = vrot.slane %v256, %v269
      %v271 = vcombine.low %v238, %v254
      %v272 = vcombine.high %v238, %v254
      %v274 = vunpack.c.l.s4 1934713408
      %v275 = vunpack.c.0.s8 %v274
      %v276 = vlaneseq
      %v277 = vshrl.u32 %v276, 7
      %v278 = vsub.s32 %v275, %v277
      %v279 = vrot.slane %v271, %v278
      %v281 = vunpack.c.l.s4 1934713408
      %v282 = vunpack.c.0.s8 %v281
      %v283 = vlaneseq
      %v284 = vshrl.u32 %v283, 7
      %v285 = vsub.s32 %v282, %v284
      %v286 = vrot.slane %v272, %v285
      %v287 = vcombine.high %v263, 0.0
      %v288 = vcombine.high %v270, 0.0
      %v289 = vcombine.high %v279, 0.0
      %v290 = vcombine.high %v286, 0.0
      %v291 = vcombine.low %v201, %v214
      %v292 = vcombine.high %v201, %v214
      %v294 = vunpack.c.l.s4 1983009808
      %v295 = vunpack.c.0.s8 %v294
      %v296 = vlaneseq
      %v297 = vshrl.u32 %v296, 7
      %v298 = vsub.s32 %v295, %v297
      %v299 = vrot.slane %v291, %v298
      %v301 = vunpack.c.l.s4 1983009808
      %v302 = vunpack.c.0.s8 %v301
      %v303 = vlaneseq
      %v304 = vshrl.u32 %v303, 7
      %v305 = vsub.s32 %v302, %v304
      %v306 = vrot.slane %v292, %v305
      %v307 = vcombine.low %v208, %v220
      %v308 = vcombine.high %v208, %v220
      %v310 = vunpack.c.l.s4 1983009808
      %v311 = vunpack.c.0.s8 %v310
      %v312 = vlaneseq
      %v313 = vshrl.u32 %v312, 7
      %v314 = vsub.s32 %v311, %v313
      %v315 = vrot.slane %v307, %v314
      %v317 = vunpack.c.l.s4 1983009808
      %v318 = vunpack.c.0.s8 %v317
      %v319 = vlaneseq
      %v320 = vshrl.u32 %v319, 7
      %v321 = vsub.s32 %v318, %v320
      %v322 = vrot.slane %v308, %v321
      %v323 = vcombine.low %v299, %v315
      %v324 = vcombine.high %v299, %v315
      %v326 = vunpack.c.l.s4 1934713408
      %v327 = vunpack.c.0.s8 %v326
      %v328 = vlaneseq
      %v329 = vshrl.u32 %v328, 7
      %v330 = vsub.s32 %v327, %v329
      %v331 = vrot.slane %v323, %v330
      %v333 = vunpack.c.l.s4 1934713408
      %v334 = vunpack.c.0.s8 %v333
      %v335 = vlaneseq
      %v336 = vshrl.u32 %v335, 7
      %v337 = vsub.s32 %v334, %v336
      %v338 = vrot.slane %v324, %v337
      %v339 = vcombine.low %v306, %v322
      %v340 = vcombine.high %v306, %v322
      %v342 = vunpack.c.l.s4 1934713408
      %v343 = vunpack.c.0.s8 %v342
      %v344 = vlaneseq
      %v345 = vshrl.u32 %v344, 7
      %v346 = vsub.s32 %v343, %v345
      %v347 = vrot.slane %v339, %v346
      %v349 = vunpack.c.l.s4 1934713408
      %v350 = vunpack.c.0.s8 %v349
      %v351 = vlaneseq
      %v352 = vshrl.u32 %v351, 7
      %v353 = vsub.s32 %v350, %v352
      %v354 = vrot.slane %v340, %v353
      %v355 = vcombine.high %v331, 0.0
      %v356 = vcombine.high %v338, 0.0
      %v357 = vcombine.high %v347, 0.0
      %v358 = vcombine.high %v354, 0.0
      %v359 = vcombine.low %v263, %v270
      %v361 = vunpack.c.l.s4 1983009808
      %v362 = vunpack.c.0.s8 %v361
      %v363 = vlaneseq
      %v364 = vshrl.u32 %v363, 7
      %v365 = vsub.s32 %v362, %v364
      %v366 = vrot.slane %v359, %v365
      %v367 = vcombine.low %v287, %v288
      %v369 = vunpack.c.l.s4 1983009808
      %v370 = vunpack.c.0.s8 %v369
      %v371 = vlaneseq
      %v372 = vshrl.u32 %v371, 7
      %v373 = vsub.s32 %v370, %v372
      %v374 = vrot.slane %v367, %v373
      %v375 = vcombine.low %v279, %v286
      %v377 = vunpack.c.l.s4 1983009808
      %v378 = vunpack.c.0.s8 %v377
      %v379 = vlaneseq
      %v380 = vshrl.u32 %v379, 7
      %v381 = vsub.s32 %v378, %v380
      %v382 = vrot.slane %v375, %v381
      %v383 = vcombine.low %v289, %v290
      %v385 = vunpack.c.l.s4 1983009808
      %v386 = vunpack.c.0.s8 %v385
      %v387 = vlaneseq
      %v388 = vshrl.u32 %v387, 7
      %v389 = vsub.s32 %v386, %v388
      %v390 = vrot.slane %v383, %v389
      %v391 = vcombine.low %v366, %v374
      %v392 = vcombine.high %v366, %v374
      %v394 = vunpack.c.l.s4 1934713408
      %v395 = vunpack.c.0.s8 %v394
      %v396 = vlaneseq
      %v397 = vshrl.u32 %v396, 7
      %v398 = vsub.s32 %v395, %v397
      %v399 = vrot.slane %v391, %v398
      %v401 = vunpack.c.l.s4 1934713408
      %v402 = vunpack.c.0.s8 %v401
      %v403 = vlaneseq
      %v404 = vshrl.u32 %v403, 7
      %v405 = vsub.s32 %v402, %v404
      %v406 = vrot.slane %v392, %v405
      %v407 = vcombine.low %v382, %v390
      %v408 = vcombine.high %v382, %v390
      %v410 = vunpack.c.l.s4 1934713408
      %v411 = vunpack.c.0.s8 %v410
      %v412 = vlaneseq
      %v413 = vshrl.u32 %v412, 7
      %v414 = vsub.s32 %v411, %v413
      %v415 = vrot.slane %v407, %v414
      %v417 = vunpack.c.l.s4 1934713408
      %v418 = vunpack.c.0.s8 %v417
      %v419 = vlaneseq
      %v420 = vshrl.u32 %v419, 7
      %v421 = vsub.s32 %v418, %v420
      %v422 = vrot.slane %v408, %v421
      %v423 = vcombine.low %v399, %v415
      %v424 = vcombine.high %v399, %v415
      %v425 = vcombine.low %v406, %v422
      %v426 = vcombine.high %v406, %v422
      %v427 = vcombine.low %v331, %v338
      %v429 = vunpack.c.l.s4 1983009808
      %v430 = vunpack.c.0.s8 %v429
      %v431 = vlaneseq
      %v432 = vshrl.u32 %v431, 7
      %v433 = vsub.s32 %v430, %v432
      %v434 = vrot.slane %v427, %v433
      %v435 = vcombine.low %v355, %v356
      %v437 = vunpack.c.l.s4 1983009808
      %v438 = vunpack.c.0.s8 %v437
      %v439 = vlaneseq
      %v440 = vshrl.u32 %v439, 7
      %v441 = vsub.s32 %v438, %v440
      %v442 = vrot.slane %v435, %v441
      %v443 = vcombine.low %v347, %v354
      %v445 = vunpack.c.l.s4 1983009808
      %v446 = vunpack.c.0.s8 %v445
      %v447 = vlaneseq
      %v448 = vshrl.u32 %v447, 7
      %v449 = vsub.s32 %v446, %v448
      %v450 = vrot.slane %v443, %v449
      %v451 = vcombine.low %v357, %v358
      %v453 = vunpack.c.l.s4 1983009808
      %v454 = vunpack.c.0.s8 %v453
      %v455 = vlaneseq
      %v456 = vshrl.u32 %v455, 7
      %v457 = vsub.s32 %v454, %v456
      %v458 = vrot.slane %v451, %v457
      %v459 = vcombine.low %v434, %v442
      %v460 = vcombine.high %v434, %v442
      %v462 = vunpack.c.l.s4 1934713408
      %v463 = vunpack.c.0.s8 %v462
      %v464 = vlaneseq
      %v465 = vshrl.u32 %v464, 7
      %v466 = vsub.s32 %v463, %v465
      %v467 = vrot.slane %v459, %v466
      %v469 = vunpack.c.l.s4 1934713408
      %v470 = vunpack.c.0.s8 %v469
      %v471 = vlaneseq
      %v472 = vshrl.u32 %v471, 7
      %v473 = vsub.s32 %v470, %v472
      %v474 = vrot.slane %v460, %v473
      %v475 = vcombine.low %v450, %v458
      %v476 = vcombine.high %v450, %v458
      %v478 = vunpack.c.l.s4 1934713408
      %v479 = vunpack.c.0.s8 %v478
      %v480 = vlaneseq
      %v481 = vshrl.u32 %v480, 7
      %v482 = vsub.s32 %v479, %v481
      %v483 = vrot.slane %v475, %v482
      %v485 = vunpack.c.l.s4 1934713408
      %v486 = vunpack.c.0.s8 %v485
      %v487 = vlaneseq
      %v488 = vshrl.u32 %v487, 7
      %v489 = vsub.s32 %v486, %v488
      %v490 = vrot.slane %v476, %v489
      %v491 = vcombine.low %v467, %v483
      %v492 = vcombine.high %v467, %v483
      %v493 = vcombine.low %v474, %v490
      %v494 = vcombine.high %v474, %v490
      %496 = vrot.lane.b32.xlu0 %v202, 120
      %v497 = vpop.permute.xlu0 %496
      %499 = vrot.lane.b32.xlu0 %v202, 112
      %v500 = vpop.permute.xlu0 %499
      %502 = vrot.lane.b32.xlu0 %v202, 104
      %v503 = vpop.permute.xlu0 %502
      %v505 = vcombine.low %v202, %v500
      %v506 = vcombine.high %v202, %v500
      %v508 = vunpack.c.l.s4 1983009808
      %v509 = vunpack.c.0.s8 %v508
      %v510 = vlaneseq
      %v511 = vshrl.u32 %v510, 7
      %v512 = vsub.s32 %v509, %v511
      %v513 = vrot.slane %v505, %v512
      %v515 = vunpack.c.l.s4 1983009808
      %v516 = vunpack.c.0.s8 %v515
      %v517 = vlaneseq
      %v518 = vshrl.u32 %v517, 7
      %v519 = vsub.s32 %v516, %v518
      %v520 = vrot.slane %v506, %v519
      %v521 = vcombine.low %v497, %v503
      %v522 = vcombine.high %v497, %v503
      %v524 = vunpack.c.l.s4 1983009808
      %v525 = vunpack.c.0.s8 %v524
      %v526 = vlaneseq
      %v527 = vshrl.u32 %v526, 7
      %v528 = vsub.s32 %v525, %v527
      %v529 = vrot.slane %v521, %v528
      %v531 = vunpack.c.l.s4 1983009808
      %v532 = vunpack.c.0.s8 %v531
      %v533 = vlaneseq
      %v534 = vshrl.u32 %v533, 7
      %v535 = vsub.s32 %v532, %v534
      %v536 = vrot.slane %v522, %v535
      %v537 = vcombine.low %v513, %v529
      %v538 = vcombine.high %v513, %v529
      %v540 = vunpack.c.l.s4 1934713408
      %v541 = vunpack.c.0.s8 %v540
      %v542 = vlaneseq
      %v543 = vshrl.u32 %v542, 7
      %v544 = vsub.s32 %v541, %v543
      %v545 = vrot.slane %v537, %v544
      %v547 = vunpack.c.l.s4 1934713408
      %v548 = vunpack.c.0.s8 %v547
      %v549 = vlaneseq
      %v550 = vshrl.u32 %v549, 7
      %v551 = vsub.s32 %v548, %v550
      %v552 = vrot.slane %v538, %v551
      %v553 = vcombine.low %v520, %v536
      %v554 = vcombine.high %v520, %v536
      %v556 = vunpack.c.l.s4 1934713408
      %v557 = vunpack.c.0.s8 %v556
      %v558 = vlaneseq
      %v559 = vshrl.u32 %v558, 7
      %v560 = vsub.s32 %v557, %v559
      %v561 = vrot.slane %v553, %v560
      %v563 = vunpack.c.l.s4 1934713408
      %v564 = vunpack.c.0.s8 %v563
      %v565 = vlaneseq
      %v566 = vshrl.u32 %v565, 7
      %v567 = vsub.s32 %v564, %v566
      %v568 = vrot.slane %v554, %v567
      %v569 = vcombine.high %v545, 0.0
      %v570 = vcombine.high %v552, 0.0
      %v571 = vcombine.high %v561, 0.0
      %v572 = vcombine.high %v568, 0.0
      %v573 = vcombine.low %v545, %v552
      %v575 = vunpack.c.l.s4 1983009808
      %v576 = vunpack.c.0.s8 %v575
      %v577 = vlaneseq
      %v578 = vshrl.u32 %v577, 7
      %v579 = vsub.s32 %v576, %v578
      %v580 = vrot.slane %v573, %v579
      %v581 = vcombine.low %v569, %v570
      %v583 = vunpack.c.l.s4 1983009808
      %v584 = vunpack.c.0.s8 %v583
      %v585 = vlaneseq
      %v586 = vshrl.u32 %v585, 7
      %v587 = vsub.s32 %v584, %v586
      %v588 = vrot.slane %v581, %v587
      %v589 = vcombine.low %v561, %v568
      %v591 = vunpack.c.l.s4 1983009808
      %v592 = vunpack.c.0.s8 %v591
      %v593 = vlaneseq
      %v594 = vshrl.u32 %v593, 7
      %v595 = vsub.s32 %v592, %v594
      %v596 = vrot.slane %v589, %v595
      %v597 = vcombine.low %v571, %v572
      %v599 = vunpack.c.l.s4 1983009808
      %v600 = vunpack.c.0.s8 %v599
      %v601 = vlaneseq
      %v602 = vshrl.u32 %v601, 7
      %v603 = vsub.s32 %v600, %v602
      %v604 = vrot.slane %v597, %v603
      %v605 = vcombine.low %v580, %v588
      %v606 = vcombine.high %v580, %v588
      %v608 = vunpack.c.l.s4 1934713408
      %v609 = vunpack.c.0.s8 %v608
      %v610 = vlaneseq
      %v611 = vshrl.u32 %v610, 7
      %v612 = vsub.s32 %v609, %v611
      %v613 = vrot.slane %v605, %v612
      %v615 = vunpack.c.l.s4 1934713408
      %v616 = vunpack.c.0.s8 %v615
      %v617 = vlaneseq
      %v618 = vshrl.u32 %v617, 7
      %v619 = vsub.s32 %v616, %v618
      %v620 = vrot.slane %v606, %v619
      %v621 = vcombine.low %v596, %v604
      %v622 = vcombine.high %v596, %v604
      %v624 = vunpack.c.l.s4 1934713408
      %v625 = vunpack.c.0.s8 %v624
      %v626 = vlaneseq
      %v627 = vshrl.u32 %v626, 7
      %v628 = vsub.s32 %v625, %v627
      %v629 = vrot.slane %v621, %v628
      %v631 = vunpack.c.l.s4 1934713408
      %v632 = vunpack.c.0.s8 %v631
      %v633 = vlaneseq
      %v634 = vshrl.u32 %v633, 7
      %v635 = vsub.s32 %v632, %v634
      %v636 = vrot.slane %v622, %v635
      %v637 = vcombine.low %v613, %v629
      %v638 = vcombine.high %v613, %v629
      %v639 = vcombine.low %v620, %v636
      %v640 = vcombine.high %v620, %v636
      %641 = vrot.lane.b32.xlu0 %v202, 96
      %v642 = vpop.permute.xlu0 %641
      %643 = vrot.lane.b32.xlu0 %v497, 96
      %v644 = vpop.permute.xlu0 %643
      %645 = vrot.lane.b32.xlu0 %v500, 96
      %v646 = vpop.permute.xlu0 %645
      %647 = vrot.lane.b32.xlu0 %v503, 96
      %v648 = vpop.permute.xlu0 %647
      %v653 = vcombine.low %v642, %v646
      %v654 = vcombine.high %v642, %v646
      %v656 = vunpack.c.l.s4 1983009808
      %v657 = vunpack.c.0.s8 %v656
      %v658 = vlaneseq
      %v659 = vshrl.u32 %v658, 7
      %v660 = vsub.s32 %v657, %v659
      %v661 = vrot.slane %v653, %v660
      %v663 = vunpack.c.l.s4 1983009808
      %v664 = vunpack.c.0.s8 %v663
      %v665 = vlaneseq
      %v666 = vshrl.u32 %v665, 7
      %v667 = vsub.s32 %v664, %v666
      %v668 = vrot.slane %v654, %v667
      %v669 = vcombine.low %v644, %v648
      %v670 = vcombine.high %v644, %v648
      %v672 = vunpack.c.l.s4 1983009808
      %v673 = vunpack.c.0.s8 %v672
      %v674 = vlaneseq
      %v675 = vshrl.u32 %v674, 7
      %v676 = vsub.s32 %v673, %v675
      %v677 = vrot.slane %v669, %v676
      %v679 = vunpack.c.l.s4 1983009808
      %v680 = vunpack.c.0.s8 %v679
      %v681 = vlaneseq
      %v682 = vshrl.u32 %v681, 7
      %v683 = vsub.s32 %v680, %v682
      %v684 = vrot.slane %v670, %v683
      %v685 = vcombine.low %v661, %v677
      %v686 = vcombine.high %v661, %v677
      %v688 = vunpack.c.l.s4 1934713408
      %v689 = vunpack.c.0.s8 %v688
      %v690 = vlaneseq
      %v691 = vshrl.u32 %v690, 7
      %v692 = vsub.s32 %v689, %v691
      %v693 = vrot.slane %v685, %v692
      %v695 = vunpack.c.l.s4 1934713408
      %v696 = vunpack.c.0.s8 %v695
      %v697 = vlaneseq
      %v698 = vshrl.u32 %v697, 7
      %v699 = vsub.s32 %v696, %v698
      %v700 = vrot.slane %v686, %v699
      %v701 = vcombine.low %v668, %v684
      %v702 = vcombine.high %v668, %v684
      %v704 = vunpack.c.l.s4 1934713408
      %v705 = vunpack.c.0.s8 %v704
      %v706 = vlaneseq
      %v707 = vshrl.u32 %v706, 7
      %v708 = vsub.s32 %v705, %v707
      %v709 = vrot.slane %v701, %v708
      %v711 = vunpack.c.l.s4 1934713408
      %v712 = vunpack.c.0.s8 %v711
      %v713 = vlaneseq
      %v714 = vshrl.u32 %v713, 7
      %v715 = vsub.s32 %v712, %v714
      %v716 = vrot.slane %v702, %v715
      %v717 = vcombine.high %v693, 0.0
      %v718 = vcombine.high %v700, 0.0
      %v719 = vcombine.high %v709, 0.0
      %v720 = vcombine.high %v716, 0.0
      %v721 = vcombine.low %v693, %v700
      %v723 = vunpack.c.l.s4 1983009808
      %v724 = vunpack.c.0.s8 %v723
      %v725 = vlaneseq
      %v726 = vshrl.u32 %v725, 7
      %v727 = vsub.s32 %v724, %v726
      %v728 = vrot.slane %v721, %v727
      %v729 = vcombine.low %v717, %v718
      %v731 = vunpack.c.l.s4 1983009808
      %v732 = vunpack.c.0.s8 %v731
      %v733 = vlaneseq
      %v734 = vshrl.u32 %v733, 7
      %v735 = vsub.s32 %v732, %v734
      %v736 = vrot.slane %v729, %v735
      %v737 = vcombine.low %v709, %v716
      %v739 = vunpack.c.l.s4 1983009808
      %v740 = vunpack.c.0.s8 %v739
      %v741 = vlaneseq
      %v742 = vshrl.u32 %v741, 7
      %v743 = vsub.s32 %v740, %v742
      %v744 = vrot.slane %v737, %v743
      %v745 = vcombine.low %v719, %v720
      %v747 = vunpack.c.l.s4 1983009808
      %v748 = vunpack.c.0.s8 %v747
      %v749 = vlaneseq
      %v750 = vshrl.u32 %v749, 7
      %v751 = vsub.s32 %v748, %v750
      %v752 = vrot.slane %v745, %v751
      %v753 = vcombine.low %v728, %v736
      %v754 = vcombine.high %v728, %v736
      %v756 = vunpack.c.l.s4 1934713408
      %v757 = vunpack.c.0.s8 %v756
      %v758 = vlaneseq
      %v759 = vshrl.u32 %v758, 7
      %v760 = vsub.s32 %v757, %v759
      %v761 = vrot.slane %v753, %v760
      %v763 = vunpack.c.l.s4 1934713408
      %v764 = vunpack.c.0.s8 %v763
      %v765 = vlaneseq
      %v766 = vshrl.u32 %v765, 7
      %v767 = vsub.s32 %v764, %v766
      %v768 = vrot.slane %v754, %v767
      %v769 = vcombine.low %v744, %v752
      %v770 = vcombine.high %v744, %v752
      %v772 = vunpack.c.l.s4 1934713408
      %v773 = vunpack.c.0.s8 %v772
      %v774 = vlaneseq
      %v775 = vshrl.u32 %v774, 7
      %v776 = vsub.s32 %v773, %v775
      %v777 = vrot.slane %v769, %v776
      %v779 = vunpack.c.l.s4 1934713408
      %v780 = vunpack.c.0.s8 %v779
      %v781 = vlaneseq
      %v782 = vshrl.u32 %v781, 7
      %v783 = vsub.s32 %v780, %v782
      %v784 = vrot.slane %v770, %v783
      %v785 = vcombine.low %v761, %v777
      %v786 = vcombine.high %v761, %v777
      %v787 = vcombine.low %v768, %v784
      %v788 = vcombine.high %v768, %v784
      %vm789 = vcmask 64512
      %v791 = vsel %vm789, %v423, 0
      %v794 = vsel %vm789, %v491, 0
      %v797 = vsel %vm789, %v637, 0
      %799 = vmatprep.subr.mxu0 0.0
      %800 = vmatpush1.xpose.msra.mxu0 %v797
      %801 = vmatprep.subr.mxu0 0.0
      %802 = vmatpush1.xpose.msra.mxu0 0.0
      %803 = vmatprep.subr.mxu0 0.0
      %804 = vmatpush1.xpose.msra.mxu0 0.0
      %805 = vmatprep.subr.mxu0 0.0
      %806 = vmatpush1.xpose.msra.mxu0 0.0
      %807 = vmatprep.subr.mxu0 0.0
      %808 = vmatpush1.xpose.msra.mxu0 0.0
      %809 = vmatprep.subr.mxu0 0.0
      %810 = vmatpush1.xpose.msra.mxu0 0.0
      %811 = vmatprep.subr.mxu0 0.0
      %812 = vmatpush1.xpose.msra.mxu0 0.0
      %813 = vmatprep.subr.mxu0 0.0
      %814 = vmatpush1.xpose.msra.mxu0 0.0
      %815 = vmatprep.subr.mxu0 0.0
      %816 = vmatpush1.xpose.msra.mxu0 0.0
      %817 = vmatprep.subr.mxu0 0.0
      %818 = vmatpush1.xpose.msra.mxu0 0.0
      %819 = vmatprep.subr.mxu0 0.0
      %820 = vmatpush1.xpose.msra.mxu0 0.0
      %821 = vmatprep.subr.mxu0 0.0
      %822 = vmatpush1.xpose.msra.mxu0 0.0
      %823 = vmatprep.subr.mxu0 0.0
      %824 = vmatpush1.xpose.msra.mxu0 0.0
      %825 = vmatprep.subr.mxu0 0.0
      %826 = vmatpush1.xpose.msra.mxu0 0.0
      %827 = vmatprep.subr.mxu0 0.0
      %828 = vmatpush1.xpose.msra.mxu0 0.0
      %829 = vmatprep.subr.mxu0 0.0
      %830 = vmatpush1.xpose.msra.mxu0 0.0
      %831 = vmatprep.subr.mxu0 0.0
      %832 = vmatpush1.xpose.msra.mxu0 0.0
      %833 = vmatprep.subr.mxu0 0.0
      %834 = vmatpush1.xpose.msra.mxu0 0.0
      %835 = vmatprep.subr.mxu0 0.0
      %836 = vmatpush1.xpose.msra.mxu0 0.0
      %837 = vmatprep.subr.mxu0 0.0
      %838 = vmatpush1.xpose.msra.mxu0 0.0
      %839 = vmatprep.subr.mxu0 0.0
      %840 = vmatpush1.xpose.msra.mxu0 0.0
      %841 = vmatprep.subr.mxu0 0.0
      %842 = vmatpush1.xpose.msra.mxu0 0.0
      %843 = vmatprep.subr.mxu0 0.0
      %844 = vmatpush1.xpose.msra.mxu0 0.0
      %845 = vmatprep.subr.mxu0 0.0
      %846 = vmatpush1.xpose.msra.mxu0 0.0
      %847 = vmatprep.subr.mxu0 0.0
      %848 = vmatpush1.xpose.msra.mxu0 0.0
      %849 = vmatprep.subr.mxu0 0.0
      %850 = vmatpush1.xpose.msra.mxu0 0.0
      %851 = vmatprep.subr.mxu0 0.0
      %852 = vmatpush1.xpose.msra.mxu0 0.0
      %853 = vmatprep.subr.mxu0 0.0
      %854 = vmatpush1.xpose.msra.mxu0 0.0
      %855 = vmatprep.subr.mxu0 0.0
      %856 = vmatpush1.xpose.msra.mxu0 0.0
      %857 = vmatprep.subr.mxu0 0.0
      %858 = vmatpush1.xpose.msra.mxu0 0.0
      %859 = vmatprep.subr.mxu0 0.0
      %860 = vmatpush1.xpose.msra.mxu0 0.0
      %861 = vmatprep.subr.mxu0 0.0
      %862 = vmatpush1.xpose.msra.mxu0 0.0
      %863 = vmatprep.mubr.f32.mxu0 0.0
      %864 = vmatmul.mubr.f32.gmra.mrb[0].mxu0 %v791
      %v865 = vpop.f32.mrb[0].mxu0
      %v866 = vadd.f32 0.0, %v865
      %v867 = vpop.f32.mrb[0].mxu0
      %868 = vmatprep.mubr.f32.mxu0 0.0
      %869 = vmatmul.mubr.f32.gmra.mrb[0].mxu0 %v794
      %v870 = vpop.f32.mrb[0].mxu0
      %v871 = vadd.f32 0.0, %v870
      %v872 = vpop.f32.mrb[0].mxu0
      %873 = vdwg.mxu0
      %v875 = vsel %vm789, %v424, 0
      %v878 = vsel %vm789, %v492, 0
      %v881 = vsel %vm789, %v638, 0
      %883 = vmatprep.subr.mxu0 0.0
      %884 = vmatpush1.xpose.msra.mxu0 %v881
      %885 = vmatprep.subr.mxu0 0.0
      %886 = vmatpush1.xpose.msra.mxu0 0.0
      %887 = vmatprep.subr.mxu0 0.0
      %888 = vmatpush1.xpose.msra.mxu0 0.0
      %889 = vmatprep.subr.mxu0 0.0
      %890 = vmatpush1.xpose.msra.mxu0 0.0
      %891 = vmatprep.subr.mxu0 0.0
      %892 = vmatpush1.xpose.msra.mxu0 0.0
      %893 = vmatprep.subr.mxu0 0.0
      %894 = vmatpush1.xpose.msra.mxu0 0.0
      %895 = vmatprep.subr.mxu0 0.0
      %896 = vmatpush1.xpose.msra.mxu0 0.0
      %897 = vmatprep.subr.mxu0 0.0
      %898 = vmatpush1.xpose.msra.mxu0 0.0
      %899 = vmatprep.subr.mxu0 0.0
      %900 = vmatpush1.xpose.msra.mxu0 0.0
      %901 = vmatprep.subr.mxu0 0.0
      %902 = vmatpush1.xpose.msra.mxu0 0.0
      %903 = vmatprep.subr.mxu0 0.0
      %904 = vmatpush1.xpose.msra.mxu0 0.0
      %905 = vmatprep.subr.mxu0 0.0
      %906 = vmatpush1.xpose.msra.mxu0 0.0
      %907 = vmatprep.subr.mxu0 0.0
      %908 = vmatpush1.xpose.msra.mxu0 0.0
      %909 = vmatprep.subr.mxu0 0.0
      %910 = vmatpush1.xpose.msra.mxu0 0.0
      %911 = vmatprep.subr.mxu0 0.0
      %912 = vmatpush1.xpose.msra.mxu0 0.0
      %913 = vmatprep.subr.mxu0 0.0
      %914 = vmatpush1.xpose.msra.mxu0 0.0
      %915 = vmatprep.subr.mxu0 0.0
      %916 = vmatpush1.xpose.msra.mxu0 0.0
      %917 = vmatprep.subr.mxu0 0.0
      %918 = vmatpush1.xpose.msra.mxu0 0.0
      %919 = vmatprep.subr.mxu0 0.0
      %920 = vmatpush1.xpose.msra.mxu0 0.0
      %921 = vmatprep.subr.mxu0 0.0
      %922 = vmatpush1.xpose.msra.mxu0 0.0
      %923 = vmatprep.subr.mxu0 0.0
      %924 = vmatpush1.xpose.msra.mxu0 0.0
      %925 = vmatprep.subr.mxu0 0.0
      %926 = vmatpush1.xpose.msra.mxu0 0.0
      %927 = vmatprep.subr.mxu0 0.0
      %928 = vmatpush1.xpose.msra.mxu0 0.0
      %929 = vmatprep.subr.mxu0 0.0
      %930 = vmatpush1.xpose.msra.mxu0 0.0
      %931 = vmatprep.subr.mxu0 0.0
      %932 = vmatpush1.xpose.msra.mxu0 0.0
      %933 = vmatprep.subr.mxu0 0.0
      %934 = vmatpush1.xpose.msra.mxu0 0.0
      %935 = vmatprep.subr.mxu0 0.0
      %936 = vmatpush1.xpose.msra.mxu0 0.0
      %937 = vmatprep.subr.mxu0 0.0
      %938 = vmatpush1.xpose.msra.mxu0 0.0
      %939 = vmatprep.subr.mxu0 0.0
      %940 = vmatpush1.xpose.msra.mxu0 0.0
      %941 = vmatprep.subr.mxu0 0.0
      %942 = vmatpush1.xpose.msra.mxu0 0.0
      %943 = vmatprep.subr.mxu0 0.0
      %944 = vmatpush1.xpose.msra.mxu0 0.0
      %945 = vmatprep.subr.mxu0 0.0
      %946 = vmatpush1.xpose.msra.mxu0 0.0
      %947 = vmatprep.mubr.f32.mxu0 0.0
      %948 = vmatmul.mubr.f32.gmra.mrb[0].mxu0 %v875
      %v949 = vpop.f32.mrb[0].mxu0
      %v950 = vadd.f32 0.0, %v949
      %v951 = vpop.f32.mrb[0].mxu0
      %952 = vmatprep.mubr.f32.mxu0 0.0
      %953 = vmatmul.mubr.f32.gmra.mrb[0].mxu0 %v878
      %v954 = vpop.f32.mrb[0].mxu0
      %v955 = vadd.f32 0.0, %v954
      %v956 = vpop.f32.mrb[0].mxu0
      %957 = vdwg.mxu0
      %v959 = vsel %vm789, %v425, 0
      %v962 = vsel %vm789, %v493, 0
      %v965 = vsel %vm789, %v639, 0
      %967 = vmatprep.subr.mxu0 0.0
      %968 = vmatpush1.xpose.msra.mxu0 %v965
      %969 = vmatprep.subr.mxu0 0.0
      %970 = vmatpush1.xpose.msra.mxu0 0.0
      %971 = vmatprep.subr.mxu0 0.0
      %972 = vmatpush1.xpose.msra.mxu0 0.0
      %973 = vmatprep.subr.mxu0 0.0
      %974 = vmatpush1.xpose.msra.mxu0 0.0
      %975 = vmatprep.subr.mxu0 0.0
      %976 = vmatpush1.xpose.msra.mxu0 0.0
      %977 = vmatprep.subr.mxu0 0.0
      %978 = vmatpush1.xpose.msra.mxu0 0.0
      %979 = vmatprep.subr.mxu0 0.0
      %980 = vmatpush1.xpose.msra.mxu0 0.0
      %981 = vmatprep.subr.mxu0 0.0
      %982 = vmatpush1.xpose.msra.mxu0 0.0
      %983 = vmatprep.subr.mxu0 0.0
      %984 = vmatpush1.xpose.msra.mxu0 0.0
      %985 = vmatprep.subr.mxu0 0.0
      %986 = vmatpush1.xpose.msra.mxu0 0.0
      %987 = vmatprep.subr.mxu0 0.0
      %988 = vmatpush1.xpose.msra.mxu0 0.0
      %989 = vmatprep.subr.mxu0 0.0
      %990 = vmatpush1.xpose.msra.mxu0 0.0
      %991 = vmatprep.subr.mxu0 0.0
      %992 = vmatpush1.xpose.msra.mxu0 0.0
      %993 = vmatprep.subr.mxu0 0.0
      %994 = vmatpush1.xpose.msra.mxu0 0.0
      %995 = vmatprep.subr.mxu0 0.0
      %996 = vmatpush1.xpose.msra.mxu0 0.0
      %997 = vmatprep.subr.mxu0 0.0
      %998 = vmatpush1.xpose.msra.mxu0 0.0
      %999 = vmatprep.subr.mxu0 0.0
      %1000 = vmatpush1.xpose.msra.mxu0 0.0
      %1001 = vmatprep.subr.mxu0 0.0
      %1002 = vmatpush1.xpose.msra.mxu0 0.0
      %1003 = vmatprep.subr.mxu0 0.0
      %1004 = vmatpush1.xpose.msra.mxu0 0.0
      %1005 = vmatprep.subr.mxu0 0.0
      %1006 = vmatpush1.xpose.msra.mxu0 0.0
      %1007 = vmatprep.subr.mxu0 0.0
      %1008 = vmatpush1.xpose.msra.mxu0 0.0
      %1009 = vmatprep.subr.mxu0 0.0
      %1010 = vmatpush1.xpose.msra.mxu0 0.0
      %1011 = vmatprep.subr.mxu0 0.0
      %1012 = vmatpush1.xpose.msra.mxu0 0.0
      %1013 = vmatprep.subr.mxu0 0.0
      %1014 = vmatpush1.xpose.msra.mxu0 0.0
      %1015 = vmatprep.subr.mxu0 0.0
      %1016 = vmatpush1.xpose.msra.mxu0 0.0
      %1017 = vmatprep.subr.mxu0 0.0
      %1018 = vmatpush1.xpose.msra.mxu0 0.0
      %1019 = vmatprep.subr.mxu0 0.0
      %1020 = vmatpush1.xpose.msra.mxu0 0.0
      %1021 = vmatprep.subr.mxu0 0.0
      %1022 = vmatpush1.xpose.msra.mxu0 0.0
      %1023 = vmatprep.subr.mxu0 0.0
      %1024 = vmatpush1.xpose.msra.mxu0 0.0
      %1025 = vmatprep.subr.mxu0 0.0
      %1026 = vmatpush1.xpose.msra.mxu0 0.0
      %1027 = vmatprep.subr.mxu0 0.0
      %1028 = vmatpush1.xpose.msra.mxu0 0.0
      %1029 = vmatprep.subr.mxu0 0.0
      %1030 = vmatpush1.xpose.msra.mxu0 0.0
      %1031 = vmatprep.mubr.f32.mxu0 0.0
      %1032 = vmatmul.mubr.f32.gmra.mrb[0].mxu0 %v959
      %v1033 = vpop.f32.mrb[0].mxu0
      %v1034 = vadd.f32 0.0, %v1033
      %v1035 = vpop.f32.mrb[0].mxu0
      %1036 = vmatprep.mubr.f32.mxu0 0.0
      %1037 = vmatmul.mubr.f32.gmra.mrb[0].mxu0 %v962
      %v1038 = vpop.f32.mrb[0].mxu0
      %v1039 = vadd.f32 0.0, %v1038
      %v1040 = vpop.f32.mrb[0].mxu0
      %1041 = vdwg.mxu0
      %v1043 = vsel %vm789, %v426, 0
      %v1046 = vsel %vm789, %v494, 0
      %v1049 = vsel %vm789, %v640, 0
      %1051 = vmatprep.subr.mxu0 0.0
      %1052 = vmatpush1.xpose.msra.mxu0 %v1049
      %1053 = vmatprep.subr.mxu0 0.0
      %1054 = vmatpush1.xpose.msra.mxu0 0.0
      %1055 = vmatprep.subr.mxu0 0.0
      %1056 = vmatpush1.xpose.msra.mxu0 0.0
      %1057 = vmatprep.subr.mxu0 0.0
      %1058 = vmatpush1.xpose.msra.mxu0 0.0
      %1059 = vmatprep.subr.mxu0 0.0
      %1060 = vmatpush1.xpose.msra.mxu0 0.0
      %1061 = vmatprep.subr.mxu0 0.0
      %1062 = vmatpush1.xpose.msra.mxu0 0.0
      %1063 = vmatprep.subr.mxu0 0.0
      %1064 = vmatpush1.xpose.msra.mxu0 0.0
      %1065 = vmatprep.subr.mxu0 0.0
      %1066 = vmatpush1.xpose.msra.mxu0 0.0
      %1067 = vmatprep.subr.mxu0 0.0
      %1068 = vmatpush1.xpose.msra.mxu0 0.0
      %1069 = vmatprep.subr.mxu0 0.0
      %1070 = vmatpush1.xpose.msra.mxu0 0.0
      %1071 = vmatprep.subr.mxu0 0.0
      %1072 = vmatpush1.xpose.msra.mxu0 0.0
      %1073 = vmatprep.subr.mxu0 0.0
      %1074 = vmatpush1.xpose.msra.mxu0 0.0
      %1075 = vmatprep.subr.mxu0 0.0
      %1076 = vmatpush1.xpose.msra.mxu0 0.0
      %1077 = vmatprep.subr.mxu0 0.0
      %1078 = vmatpush1.xpose.msra.mxu0 0.0
      %1079 = vmatprep.subr.mxu0 0.0
      %1080 = vmatpush1.xpose.msra.mxu0 0.0
      %1081 = vmatprep.subr.mxu0 0.0
      %1082 = vmatpush1.xpose.msra.mxu0 0.0
      %1083 = vmatprep.subr.mxu0 0.0
      %1084 = vmatpush1.xpose.msra.mxu0 0.0
      %1085 = vmatprep.subr.mxu0 0.0
      %1086 = vmatpush1.xpose.msra.mxu0 0.0
      %1087 = vmatprep.subr.mxu0 0.0
      %1088 = vmatpush1.xpose.msra.mxu0 0.0
      %1089 = vmatprep.subr.mxu0 0.0
      %1090 = vmatpush1.xpose.msra.mxu0 0.0
      %1091 = vmatprep.subr.mxu0 0.0
      %1092 = vmatpush1.xpose.msra.mxu0 0.0
      %1093 = vmatprep.subr.mxu0 0.0
      %1094 = vmatpush1.xpose.msra.mxu0 0.0
      %1095 = vmatprep.subr.mxu0 0.0
      %1096 = vmatpush1.xpose.msra.mxu0 0.0
      %1097 = vmatprep.subr.mxu0 0.0
      %1098 = vmatpush1.xpose.msra.mxu0 0.0
      %1099 = vmatprep.subr.mxu0 0.0
      %1100 = vmatpush1.xpose.msra.mxu0 0.0
      %1101 = vmatprep.subr.mxu0 0.0
      %1102 = vmatpush1.xpose.msra.mxu0 0.0
      %1103 = vmatprep.subr.mxu0 0.0
      %1104 = vmatpush1.xpose.msra.mxu0 0.0
      %1105 = vmatprep.subr.mxu0 0.0
      %1106 = vmatpush1.xpose.msra.mxu0 0.0
      %1107 = vmatprep.subr.mxu0 0.0
      %1108 = vmatpush1.xpose.msra.mxu0 0.0
      %1109 = vmatprep.subr.mxu0 0.0
      %1110 = vmatpush1.xpose.msra.mxu0 0.0
      %1111 = vmatprep.subr.mxu0 0.0
      %1112 = vmatpush1.xpose.msra.mxu0 0.0
      %1113 = vmatprep.subr.mxu0 0.0
      %1114 = vmatpush1.xpose.msra.mxu0 0.0
      %1115 = vmatprep.mubr.f32.mxu0 0.0
      %1116 = vmatmul.mubr.f32.gmra.mrb[0].mxu0 %v1043
      %v1117 = vpop.f32.mrb[0].mxu0
      %v1118 = vadd.f32 0.0, %v1117
      %v1119 = vpop.f32.mrb[0].mxu0
      %1120 = vmatprep.mubr.f32.mxu0 0.0
      %1121 = vmatmul.mubr.f32.gmra.mrb[0].mxu0 %v1046
      %v1122 = vpop.f32.mrb[0].mxu0
      %v1123 = vadd.f32 0.0, %v1122
      %v1124 = vpop.f32.mrb[0].mxu0
      %1125 = vdwg.mxu0
      %v1126 = vsel %vm789, %v866, -inf
      %1127 = vmax.xlane.f32.xlu0 %v1126
      %v1128 = vpop.xlane.xlu0 %1127
      %v1129 = vsel %vm789, %v871, -inf
      %1130 = vmax.xlane.f32.xlu0 %v1129
      %v1131 = vpop.xlane.xlu0 %1130
      %v1132 = vsel %vm789, %v950, -inf
      %1133 = vmax.xlane.f32.xlu0 %v1132
      %v1134 = vpop.xlane.xlu0 %1133
      %v1135 = vsel %vm789, %v955, -inf
      %1136 = vmax.xlane.f32.xlu0 %v1135
      %v1137 = vpop.xlane.xlu0 %1136
      %v1138 = vsel %vm789, %v1034, -inf
      %1139 = vmax.xlane.f32.xlu0 %v1138
      %v1140 = vpop.xlane.xlu0 %1139
      %v1141 = vsel %vm789, %v1039, -inf
      %1142 = vmax.xlane.f32.xlu0 %v1141
      %v1143 = vpop.xlane.xlu0 %1142
      %v1144 = vsel %vm789, %v1118, -inf
      %1145 = vmax.xlane.f32.xlu0 %v1144
      %v1146 = vpop.xlane.xlu0 %1145
      %v1147 = vsel %vm789, %v1123, -inf
      %1148 = vmax.xlane.f32.xlu0 %v1147
      %v1149 = vpop.xlane.xlu0 %1148
      %v1150 = vsub.f32 %v866, %v1128
      %v1151 = vsub.f32 %v871, %v1131
      %v1152 = vsub.f32 %v950, %v1134
      %v1153 = vsub.f32 %v955, %v1137
      %v1154 = vsub.f32 %v1034, %v1140
      %v1155 = vsub.f32 %v1039, %v1143
      %v1156 = vsub.f32 %v1118, %v1146
      %v1157 = vsub.f32 %v1123, %v1149
      %v1158 = vmul.f32 %v1150, 1.442695
      %v1159 = vpow.pop %v1158
      %v1160 = vmul.f32 %v1151, 1.442695
      %v1161 = vpow.pop %v1160
      %v1162 = vmul.f32 %v1152, 1.442695
      %v1163 = vpow.pop %v1162
      %v1164 = vmul.f32 %v1153, 1.442695
      %v1165 = vpow.pop %v1164
      %v1166 = vmul.f32 %v1154, 1.442695
      %v1167 = vpow.pop %v1166
      %v1168 = vmul.f32 %v1155, 1.442695
      %v1169 = vpow.pop %v1168
      %v1170 = vmul.f32 %v1156, 1.442695
      %v1171 = vpow.pop %v1170
      %v1172 = vmul.f32 %v1157, 1.442695
      %v1173 = vpow.pop %v1172
      %v1174 = vsel %vm789, %v1159, 0.0
      %1175 = vadd.xlane.f32.xlu0 %v1174
      %v1176 = vpop.xlane.xlu0 %1175
      %v1177 = vsel %vm789, %v1161, 0.0
      %1178 = vadd.xlane.f32.xlu0 %v1177
      %v1179 = vpop.xlane.xlu0 %1178
      %v1180 = vsel %vm789, %v1163, 0.0
      %1181 = vadd.xlane.f32.xlu0 %v1180
      %v1182 = vpop.xlane.xlu0 %1181
      %v1183 = vsel %vm789, %v1165, 0.0
      %1184 = vadd.xlane.f32.xlu0 %v1183
      %v1185 = vpop.xlane.xlu0 %1184
      %v1186 = vsel %vm789, %v1167, 0.0
      %1187 = vadd.xlane.f32.xlu0 %v1186
      %v1188 = vpop.xlane.xlu0 %1187
      %v1189 = vsel %vm789, %v1169, 0.0
      %1190 = vadd.xlane.f32.xlu0 %v1189
      %v1191 = vpop.xlane.xlu0 %1190
      %v1192 = vsel %vm789, %v1171, 0.0
      %1193 = vadd.xlane.f32.xlu0 %v1192
      %v1194 = vpop.xlane.xlu0 %1193
      %v1195 = vsel %vm789, %v1173, 0.0
      %1196 = vadd.xlane.f32.xlu0 %v1195
      %v1197 = vpop.xlane.xlu0 %1196
      %v1199 = vsel %vm789, %v1159, 0
      %v1202 = vsel %vm789, %v1161, 0
      %1204 = vmatprep.subr.mxu0 0.0
      %1205 = vmatpush1.msra.mxu0 %v785
      %1206 = vmatprep.subr.mxu0 0.0
      %1207 = vmatpush1.msra.mxu0 0.0
      %1208 = vmatprep.subr.mxu0 0.0
      %1209 = vmatpush1.msra.mxu0 0.0
      %1210 = vmatprep.subr.mxu0 0.0
      %1211 = vmatpush1.msra.mxu0 0.0
      %1212 = vmatprep.subr.mxu0 0.0
      %1213 = vmatpush1.msra.mxu0 0.0
      %1214 = vmatprep.subr.mxu0 0.0
      %1215 = vmatpush1.msra.mxu0 0.0
      %1216 = vmatprep.subr.mxu0 0.0
      %1217 = vmatpush1.msra.mxu0 0.0
      %1218 = vmatprep.subr.mxu0 0.0
      %1219 = vmatpush1.msra.mxu0 0.0
      %1220 = vmatprep.subr.mxu0 0.0
      %1221 = vmatpush1.msra.mxu0 0.0
      %1222 = vmatprep.subr.mxu0 0.0
      %1223 = vmatpush1.msra.mxu0 0.0
      %1224 = vmatprep.subr.mxu0 0.0
      %1225 = vmatpush1.msra.mxu0 0.0
      %1226 = vmatprep.subr.mxu0 0.0
      %1227 = vmatpush1.msra.mxu0 0.0
      %1228 = vmatprep.subr.mxu0 0.0
      %1229 = vmatpush1.msra.mxu0 0.0
      %1230 = vmatprep.subr.mxu0 0.0
      %1231 = vmatpush1.msra.mxu0 0.0
      %1232 = vmatprep.subr.mxu0 0.0
      %1233 = vmatpush1.msra.mxu0 0.0
      %1234 = vmatprep.subr.mxu0 0.0
      %1235 = vmatpush1.msra.mxu0 0.0
      %1236 = vmatprep.subr.mxu0 0.0
      %1237 = vmatpush1.msra.mxu0 0.0
      %1238 = vmatprep.subr.mxu0 0.0
      %1239 = vmatpush1.msra.mxu0 0.0
      %1240 = vmatprep.subr.mxu0 0.0
      %1241 = vmatpush1.msra.mxu0 0.0
      %1242 = vmatprep.subr.mxu0 0.0
      %1243 = vmatpush1.msra.mxu0 0.0
      %1244 = vmatprep.subr.mxu0 0.0
      %1245 = vmatpush1.msra.mxu0 0.0
      %1246 = vmatprep.subr.mxu0 0.0
      %1247 = vmatpush1.msra.mxu0 0.0
      %1248 = vmatprep.subr.mxu0 0.0
      %1249 = vmatpush1.msra.mxu0 0.0
      %1250 = vmatprep.subr.mxu0 0.0
      %1251 = vmatpush1.msra.mxu0 0.0
      %1252 = vmatprep.subr.mxu0 0.0
      %1253 = vmatpush1.msra.mxu0 0.0
      %1254 = vmatprep.subr.mxu0 0.0
      %1255 = vmatpush1.msra.mxu0 0.0
      %1256 = vmatprep.subr.mxu0 0.0
      %1257 = vmatpush1.msra.mxu0 0.0
      %1258 = vmatprep.subr.mxu0 0.0
      %1259 = vmatpush1.msra.mxu0 0.0
      %1260 = vmatprep.subr.mxu0 0.0
      %1261 = vmatpush1.msra.mxu0 0.0
      %1262 = vmatprep.subr.mxu0 0.0
      %1263 = vmatpush1.msra.mxu0 0.0
      %1264 = vmatprep.subr.mxu0 0.0
      %1265 = vmatpush1.msra.mxu0 0.0
      %1266 = vmatprep.subr.mxu0 0.0
      %1267 = vmatpush1.msra.mxu0 0.0
      %1268 = vmatprep.mubr.f32.mxu0 0.0
      %1269 = vmatmul.mubr.f32.gmra.mrb[0].mxu0 %v1199
      %v1270 = vpop.f32.mrb[0].mxu0
      %v1271 = vadd.f32 0.0, %v1270
      %v1272 = vpop.f32.mrb[0].mxu0
      %1273 = vmatprep.mubr.f32.mxu0 0.0
      %1274 = vmatmul.mubr.f32.gmra.mrb[0].mxu0 %v1202
      %v1275 = vpop.f32.mrb[0].mxu0
      %v1276 = vadd.f32 0.0, %v1275
      %v1277 = vpop.f32.mrb[0].mxu0
      %1278 = vdwg.mxu0
      %v1280 = vsel %vm789, %v1163, 0
      %v1283 = vsel %vm789, %v1165, 0
      %1285 = vmatprep.subr.mxu0 0.0
      %1286 = vmatpush1.msra.mxu0 %v786
      %1287 = vmatprep.subr.mxu0 0.0
      %1288 = vmatpush1.msra.mxu0 0.0
      %1289 = vmatprep.subr.mxu0 0.0
      %1290 = vmatpush1.msra.mxu0 0.0
      %1291 = vmatprep.subr.mxu0 0.0
      %1292 = vmatpush1.msra.mxu0 0.0
      %1293 = vmatprep.subr.mxu0 0.0
      %1294 = vmatpush1.msra.mxu0 0.0
      %1295 = vmatprep.subr.mxu0 0.0
      %1296 = vmatpush1.msra.mxu0 0.0
      %1297 = vmatprep.subr.mxu0 0.0
      %1298 = vmatpush1.msra.mxu0 0.0
      %1299 = vmatprep.subr.mxu0 0.0
      %1300 = vmatpush1.msra.mxu0 0.0
      %1301 = vmatprep.subr.mxu0 0.0
      %1302 = vmatpush1.msra.mxu0 0.0
      %1303 = vmatprep.subr.mxu0 0.0
      %1304 = vmatpush1.msra.mxu0 0.0
      %1305 = vmatprep.subr.mxu0 0.0
      %1306 = vmatpush1.msra.mxu0 0.0
      %1307 = vmatprep.subr.mxu0 0.0
      %1308 = vmatpush1.msra.mxu0 0.0
      %1309 = vmatprep.subr.mxu0 0.0
      %1310 = vmatpush1.msra.mxu0 0.0
      %1311 = vmatprep.subr.mxu0 0.0
      %1312 = vmatpush1.msra.mxu0 0.0
      %1313 = vmatprep.subr.mxu0 0.0
      %1314 = vmatpush1.msra.mxu0 0.0
      %1315 = vmatprep.subr.mxu0 0.0
      %1316 = vmatpush1.msra.mxu0 0.0
      %1317 = vmatprep.subr.mxu0 0.0
      %1318 = vmatpush1.msra.mxu0 0.0
      %1319 = vmatprep.subr.mxu0 0.0
      %1320 = vmatpush1.msra.mxu0 0.0
      %1321 = vmatprep.subr.mxu0 0.0
      %1322 = vmatpush1.msra.mxu0 0.0
      %1323 = vmatprep.subr.mxu0 0.0
      %1324 = vmatpush1.msra.mxu0 0.0
      %1325 = vmatprep.subr.mxu0 0.0
      %1326 = vmatpush1.msra.mxu0 0.0
      %1327 = vmatprep.subr.mxu0 0.0
      %1328 = vmatpush1.msra.mxu0 0.0
      %1329 = vmatprep.subr.mxu0 0.0
      %1330 = vmatpush1.msra.mxu0 0.0
      %1331 = vmatprep.subr.mxu0 0.0
      %1332 = vmatpush1.msra.mxu0 0.0
      %1333 = vmatprep.subr.mxu0 0.0
      %1334 = vmatpush1.msra.mxu0 0.0
      %1335 = vmatprep.subr.mxu0 0.0
      %1336 = vmatpush1.msra.mxu0 0.0
      %1337 = vmatprep.subr.mxu0 0.0
      %1338 = vmatpush1.msra.mxu0 0.0
      %1339 = vmatprep.subr.mxu0 0.0
      %1340 = vmatpush1.msra.mxu0 0.0
      %1341 = vmatprep.subr.mxu0 0.0
      %1342 = vmatpush1.msra.mxu0 0.0
      %1343 = vmatprep.subr.mxu0 0.0
      %1344 = vmatpush1.msra.mxu0 0.0
      %1345 = vmatprep.subr.mxu0 0.0
      %1346 = vmatpush1.msra.mxu0 0.0
      %1347 = vmatprep.subr.mxu0 0.0
      %1348 = vmatpush1.msra.mxu0 0.0
      %1349 = vmatprep.mubr.f32.mxu0 0.0
      %1350 = vmatmul.mubr.f32.gmra.mrb[0].mxu0 %v1280
      %v1351 = vpop.f32.mrb[0].mxu0
      %v1352 = vadd.f32 0.0, %v1351
      %v1353 = vpop.f32.mrb[0].mxu0
      %1354 = vmatprep.mubr.f32.mxu0 0.0
      %1355 = vmatmul.mubr.f32.gmra.mrb[0].mxu0 %v1283
      %v1356 = vpop.f32.mrb[0].mxu0
      %v1357 = vadd.f32 0.0, %v1356
      %v1358 = vpop.f32.mrb[0].mxu0
      %1359 = vdwg.mxu0
      %v1361 = vsel %vm789, %v1167, 0
      %v1364 = vsel %vm789, %v1169, 0
      %1366 = vmatprep.subr.mxu0 0.0
      %1367 = vmatpush1.msra.mxu0 %v787
      %1368 = vmatprep.subr.mxu0 0.0
      %1369 = vmatpush1.msra.mxu0 0.0
      %1370 = vmatprep.subr.mxu0 0.0
      %1371 = vmatpush1.msra.mxu0 0.0
      %1372 = vmatprep.subr.mxu0 0.0
      %1373 = vmatpush1.msra.mxu0 0.0
      %1374 = vmatprep.subr.mxu0 0.0
      %1375 = vmatpush1.msra.mxu0 0.0
      %1376 = vmatprep.subr.mxu0 0.0
      %1377 = vmatpush1.msra.mxu0 0.0
      %1378 = vmatprep.subr.mxu0 0.0
      %1379 = vmatpush1.msra.mxu0 0.0
      %1380 = vmatprep.subr.mxu0 0.0
      %1381 = vmatpush1.msra.mxu0 0.0
      %1382 = vmatprep.subr.mxu0 0.0
      %1383 = vmatpush1.msra.mxu0 0.0
      %1384 = vmatprep.subr.mxu0 0.0
      %1385 = vmatpush1.msra.mxu0 0.0
      %1386 = vmatprep.subr.mxu0 0.0
      %1387 = vmatpush1.msra.mxu0 0.0
      %1388 = vmatprep.subr.mxu0 0.0
      %1389 = vmatpush1.msra.mxu0 0.0
      %1390 = vmatprep.subr.mxu0 0.0
      %1391 = vmatpush1.msra.mxu0 0.0
      %1392 = vmatprep.subr.mxu0 0.0
      %1393 = vmatpush1.msra.mxu0 0.0
      %1394 = vmatprep.subr.mxu0 0.0
      %1395 = vmatpush1.msra.mxu0 0.0
      %1396 = vmatprep.subr.mxu0 0.0
      %1397 = vmatpush1.msra.mxu0 0.0
      %1398 = vmatprep.subr.mxu0 0.0
      %1399 = vmatpush1.msra.mxu0 0.0
      %1400 = vmatprep.subr.mxu0 0.0
      %1401 = vmatpush1.msra.mxu0 0.0
      %1402 = vmatprep.subr.mxu0 0.0
      %1403 = vmatpush1.msra.mxu0 0.0
      %1404 = vmatprep.subr.mxu0 0.0
      %1405 = vmatpush1.msra.mxu0 0.0
      %1406 = vmatprep.subr.mxu0 0.0
      %1407 = vmatpush1.msra.mxu0 0.0
      %1408 = vmatprep.subr.mxu0 0.0
      %1409 = vmatpush1.msra.mxu0 0.0
      %1410 = vmatprep.subr.mxu0 0.0
      %1411 = vmatpush1.msra.mxu0 0.0
      %1412 = vmatprep.subr.mxu0 0.0
      %1413 = vmatpush1.msra.mxu0 0.0
      %1414 = vmatprep.subr.mxu0 0.0
      %1415 = vmatpush1.msra.mxu0 0.0
      %1416 = vmatprep.subr.mxu0 0.0
      %1417 = vmatpush1.msra.mxu0 0.0
      %1418 = vmatprep.subr.mxu0 0.0
      %1419 = vmatpush1.msra.mxu0 0.0
      %1420 = vmatprep.subr.mxu0 0.0
      %1421 = vmatpush1.msra.mxu0 0.0
      %1422 = vmatprep.subr.mxu0 0.0
      %1423 = vmatpush1.msra.mxu0 0.0
      %1424 = vmatprep.subr.mxu0 0.0
      %1425 = vmatpush1.msra.mxu0 0.0
      %1426 = vmatprep.subr.mxu0 0.0
      %1427 = vmatpush1.msra.mxu0 0.0
      %1428 = vmatprep.subr.mxu0 0.0
      %1429 = vmatpush1.msra.mxu0 0.0
      %1430 = vmatprep.mubr.f32.mxu0 0.0
      %1431 = vmatmul.mubr.f32.gmra.mrb[0].mxu0 %v1361
      %v1432 = vpop.f32.mrb[0].mxu0
      %v1433 = vadd.f32 0.0, %v1432
      %v1434 = vpop.f32.mrb[0].mxu0
      %1435 = vmatprep.mubr.f32.mxu0 0.0
      %1436 = vmatmul.mubr.f32.gmra.mrb[0].mxu0 %v1364
      %v1437 = vpop.f32.mrb[0].mxu0
      %v1438 = vadd.f32 0.0, %v1437
      %v1439 = vpop.f32.mrb[0].mxu0
      %1440 = vdwg.mxu0
      %v1442 = vsel %vm789, %v1171, 0
      %v1445 = vsel %vm789, %v1173, 0
      %1447 = vmatprep.subr.mxu0 0.0
      %1448 = vmatpush1.msra.mxu0 %v788
      %1449 = vmatprep.subr.mxu0 0.0
      %1450 = vmatpush1.msra.mxu0 0.0
      %1451 = vmatprep.subr.mxu0 0.0
      %1452 = vmatpush1.msra.mxu0 0.0
      %1453 = vmatprep.subr.mxu0 0.0
      %1454 = vmatpush1.msra.mxu0 0.0
      %1455 = vmatprep.subr.mxu0 0.0
      %1456 = vmatpush1.msra.mxu0 0.0
      %1457 = vmatprep.subr.mxu0 0.0
      %1458 = vmatpush1.msra.mxu0 0.0
      %1459 = vmatprep.subr.mxu0 0.0
      %1460 = vmatpush1.msra.mxu0 0.0
      %1461 = vmatprep.subr.mxu0 0.0
      %1462 = vmatpush1.msra.mxu0 0.0
      %1463 = vmatprep.subr.mxu0 0.0
      %1464 = vmatpush1.msra.mxu0 0.0
      %1465 = vmatprep.subr.mxu0 0.0
      %1466 = vmatpush1.msra.mxu0 0.0
      %1467 = vmatprep.subr.mxu0 0.0
      %1468 = vmatpush1.msra.mxu0 0.0
      %1469 = vmatprep.subr.mxu0 0.0
      %1470 = vmatpush1.msra.mxu0 0.0
      %1471 = vmatprep.subr.mxu0 0.0
      %1472 = vmatpush1.msra.mxu0 0.0
      %1473 = vmatprep.subr.mxu0 0.0
      %1474 = vmatpush1.msra.mxu0 0.0
      %1475 = vmatprep.subr.mxu0 0.0
      %1476 = vmatpush1.msra.mxu0 0.0
      %1477 = vmatprep.subr.mxu0 0.0
      %1478 = vmatpush1.msra.mxu0 0.0
      %1479 = vmatprep.subr.mxu0 0.0
      %1480 = vmatpush1.msra.mxu0 0.0
      %1481 = vmatprep.subr.mxu0 0.0
      %1482 = vmatpush1.msra.mxu0 0.0
      %1483 = vmatprep.subr.mxu0 0.0
      %1484 = vmatpush1.msra.mxu0 0.0
      %1485 = vmatprep.subr.mxu0 0.0
      %1486 = vmatpush1.msra.mxu0 0.0
      %1487 = vmatprep.subr.mxu0 0.0
      %1488 = vmatpush1.msra.mxu0 0.0
      %1489 = vmatprep.subr.mxu0 0.0
      %1490 = vmatpush1.msra.mxu0 0.0
      %1491 = vmatprep.subr.mxu0 0.0
      %1492 = vmatpush1.msra.mxu0 0.0
      %1493 = vmatprep.subr.mxu0 0.0
      %1494 = vmatpush1.msra.mxu0 0.0
      %1495 = vmatprep.subr.mxu0 0.0
      %1496 = vmatpush1.msra.mxu0 0.0
      %1497 = vmatprep.subr.mxu0 0.0
      %1498 = vmatpush1.msra.mxu0 0.0
      %1499 = vmatprep.subr.mxu0 0.0
      %1500 = vmatpush1.msra.mxu0 0.0
      %1501 = vmatprep.subr.mxu0 0.0
      %1502 = vmatpush1.msra.mxu0 0.0
      %1503 = vmatprep.subr.mxu0 0.0
      %1504 = vmatpush1.msra.mxu0 0.0
      %1505 = vmatprep.subr.mxu0 0.0
      %1506 = vmatpush1.msra.mxu0 0.0
      %1507 = vmatprep.subr.mxu0 0.0
      %1508 = vmatpush1.msra.mxu0 0.0
      %1509 = vmatprep.subr.mxu0 0.0
      %1510 = vmatpush1.msra.mxu0 0.0
      %1511 = vmatprep.mubr.f32.mxu0 0.0
      %1512 = vmatmul.mubr.f32.gmra.mrb[0].mxu0 %v1442
      %v1513 = vpop.f32.mrb[0].mxu0
      %v1514 = vadd.f32 0.0, %v1513
      %v1515 = vpop.f32.mrb[0].mxu0
      %1516 = vmatprep.mubr.f32.mxu0 0.0
      %1517 = vmatmul.mubr.f32.gmra.mrb[0].mxu0 %v1445
      %v1518 = vpop.f32.mrb[0].mxu0
      %v1519 = vadd.f32 0.0, %v1518
      %v1520 = vpop.f32.mrb[0].mxu0
      %1521 = vdwg.mxu0
      %v1522 = vrcp.pop %v1176
      %v1523 = vmul.f32 1.0, %v1522
      %v1524 = vrcp.pop %v1179
      %v1525 = vmul.f32 1.0, %v1524
      %v1526 = vrcp.pop %v1182
      %v1527 = vmul.f32 1.0, %v1526
      %v1528 = vrcp.pop %v1185
      %v1529 = vmul.f32 1.0, %v1528
      %v1530 = vrcp.pop %v1188
      %v1531 = vmul.f32 1.0, %v1530
      %v1532 = vrcp.pop %v1191
      %v1533 = vmul.f32 1.0, %v1532
      %v1534 = vrcp.pop %v1194
      %v1535 = vmul.f32 1.0, %v1534
      %v1536 = vrcp.pop %v1197
      %v1537 = vmul.f32 1.0, %v1536
      %v1538 = vmul.f32 %v1271, %v1523
      %v1539 = vmul.f32 %v1276, %v1525
      %v1540 = vmul.f32 %v1352, %v1527
      %v1541 = vmul.f32 %v1357, %v1529
      %v1542 = vmul.f32 %v1433, %v1531
      %v1543 = vmul.f32 %v1438, %v1533
      %v1544 = vmul.f32 %v1514, %v1535
      %v1545 = vmul.f32 %v1519, %v1537
      %v1546 = vcombine.low %v1538, %v1542
      %v1547 = vcombine.high %v1538, %v1542
      %v1549 = vunpack.c.l.s4 1983009808
      %v1550 = vunpack.c.0.s8 %v1549
      %v1551 = vlaneseq
      %v1552 = vshrl.u32 %v1551, 7
      %v1553 = vsub.s32 %v1550, %v1552
      %v1554 = vrot.slane %v1546, %v1553
      %v1556 = vunpack.c.l.s4 1983009808
      %v1557 = vunpack.c.0.s8 %v1556
      %v1558 = vlaneseq
      %v1559 = vshrl.u32 %v1558, 7
      %v1560 = vsub.s32 %v1557, %v1559
      %v1561 = vrot.slane %v1547, %v1560
      %v1562 = vcombine.low %v1540, %v1544
      %v1563 = vcombine.high %v1540, %v1544
      %v1565 = vunpack.c.l.s4 1983009808
      %v1566 = vunpack.c.0.s8 %v1565
      %v1567 = vlaneseq
      %v1568 = vshrl.u32 %v1567, 7
      %v1569 = vsub.s32 %v1566, %v1568
      %v1570 = vrot.slane %v1562, %v1569
      %v1572 = vunpack.c.l.s4 1983009808
      %v1573 = vunpack.c.0.s8 %v1572
      %v1574 = vlaneseq
      %v1575 = vshrl.u32 %v1574, 7
      %v1576 = vsub.s32 %v1573, %v1575
      %v1577 = vrot.slane %v1563, %v1576
      %v1578 = vcombine.low %v1554, %v1570
      %v1579 = vcombine.high %v1554, %v1570
      %v1581 = vunpack.c.l.s4 1934713408
      %v1582 = vunpack.c.0.s8 %v1581
      %v1583 = vlaneseq
      %v1584 = vshrl.u32 %v1583, 7
      %v1585 = vsub.s32 %v1582, %v1584
      %v1586 = vrot.slane %v1578, %v1585
      %v1588 = vunpack.c.l.s4 1934713408
      %v1589 = vunpack.c.0.s8 %v1588
      %v1590 = vlaneseq
      %v1591 = vshrl.u32 %v1590, 7
      %v1592 = vsub.s32 %v1589, %v1591
      %v1593 = vrot.slane %v1579, %v1592
      %v1594 = vcombine.low %v1561, %v1577
      %v1595 = vcombine.high %v1561, %v1577
      %v1597 = vunpack.c.l.s4 1934713408
      %v1598 = vunpack.c.0.s8 %v1597
      %v1599 = vlaneseq
      %v1600 = vshrl.u32 %v1599, 7
      %v1601 = vsub.s32 %v1598, %v1600
      %v1602 = vrot.slane %v1594, %v1601
      %v1604 = vunpack.c.l.s4 1934713408
      %v1605 = vunpack.c.0.s8 %v1604
      %v1606 = vlaneseq
      %v1607 = vshrl.u32 %v1606, 7
      %v1608 = vsub.s32 %v1605, %v1607
      %v1609 = vrot.slane %v1595, %v1608
      %v1610 = vcombine.high %v1586, 0.0
      %v1611 = vcombine.high %v1593, 0.0
      %v1612 = vcombine.high %v1602, 0.0
      %v1613 = vcombine.high %v1609, 0.0
      %v1614 = vcombine.low %v1539, %v1543
      %v1615 = vcombine.high %v1539, %v1543
      %v1617 = vunpack.c.l.s4 1983009808
      %v1618 = vunpack.c.0.s8 %v1617
      %v1619 = vlaneseq
      %v1620 = vshrl.u32 %v1619, 7
      %v1621 = vsub.s32 %v1618, %v1620
      %v1622 = vrot.slane %v1614, %v1621
      %v1624 = vunpack.c.l.s4 1983009808
      %v1625 = vunpack.c.0.s8 %v1624
      %v1626 = vlaneseq
      %v1627 = vshrl.u32 %v1626, 7
      %v1628 = vsub.s32 %v1625, %v1627
      %v1629 = vrot.slane %v1615, %v1628
      %v1630 = vcombine.low %v1541, %v1545
      %v1631 = vcombine.high %v1541, %v1545
      %v1633 = vunpack.c.l.s4 1983009808
      %v1634 = vunpack.c.0.s8 %v1633
      %v1635 = vlaneseq
      %v1636 = vshrl.u32 %v1635, 7
      %v1637 = vsub.s32 %v1634, %v1636
      %v1638 = vrot.slane %v1630, %v1637
      %v1640 = vunpack.c.l.s4 1983009808
      %v1641 = vunpack.c.0.s8 %v1640
      %v1642 = vlaneseq
      %v1643 = vshrl.u32 %v1642, 7
      %v1644 = vsub.s32 %v1641, %v1643
      %v1645 = vrot.slane %v1631, %v1644
      %v1646 = vcombine.low %v1622, %v1638
      %v1647 = vcombine.high %v1622, %v1638
      %v1649 = vunpack.c.l.s4 1934713408
      %v1650 = vunpack.c.0.s8 %v1649
      %v1651 = vlaneseq
      %v1652 = vshrl.u32 %v1651, 7
      %v1653 = vsub.s32 %v1650, %v1652
      %v1654 = vrot.slane %v1646, %v1653
      %v1656 = vunpack.c.l.s4 1934713408
      %v1657 = vunpack.c.0.s8 %v1656
      %v1658 = vlaneseq
      %v1659 = vshrl.u32 %v1658, 7
      %v1660 = vsub.s32 %v1657, %v1659
      %v1661 = vrot.slane %v1647, %v1660
      %v1662 = vcombine.low %v1629, %v1645
      %v1663 = vcombine.high %v1629, %v1645
      %v1665 = vunpack.c.l.s4 1934713408
      %v1666 = vunpack.c.0.s8 %v1665
      %v1667 = vlaneseq
      %v1668 = vshrl.u32 %v1667, 7
      %v1669 = vsub.s32 %v1666, %v1668
      %v1670 = vrot.slane %v1662, %v1669
      %v1672 = vunpack.c.l.s4 1934713408
      %v1673 = vunpack.c.0.s8 %v1672
      %v1674 = vlaneseq
      %v1675 = vshrl.u32 %v1674, 7
      %v1676 = vsub.s32 %v1673, %v1675
      %v1677 = vrot.slane %v1663, %v1676
      %v1678 = vcombine.high %v1654, 0.0
      %v1679 = vcombine.high %v1661, 0.0
      %v1680 = vcombine.high %v1670, 0.0
      %v1681 = vcombine.high %v1677, 0.0
      %v1682 = vcombine.low %v1586, %v1593
      %v1684 = vunpack.c.l.s4 1983009808
      %v1685 = vunpack.c.0.s8 %v1684
      %v1686 = vlaneseq
      %v1687 = vshrl.u32 %v1686, 7
      %v1688 = vsub.s32 %v1685, %v1687
      %v1689 = vrot.slane %v1682, %v1688
      %v1690 = vcombine.low %v1610, %v1611
      %v1692 = vunpack.c.l.s4 1983009808
      %v1693 = vunpack.c.0.s8 %v1692
      %v1694 = vlaneseq
      %v1695 = vshrl.u32 %v1694, 7
      %v1696 = vsub.s32 %v1693, %v1695
      %v1697 = vrot.slane %v1690, %v1696
      %v1698 = vcombine.low %v1602, %v1609
      %v1700 = vunpack.c.l.s4 1983009808
      %v1701 = vunpack.c.0.s8 %v1700
      %v1702 = vlaneseq
      %v1703 = vshrl.u32 %v1702, 7
      %v1704 = vsub.s32 %v1701, %v1703
      %v1705 = vrot.slane %v1698, %v1704
      %v1706 = vcombine.low %v1612, %v1613
      %v1708 = vunpack.c.l.s4 1983009808
      %v1709 = vunpack.c.0.s8 %v1708
      %v1710 = vlaneseq
      %v1711 = vshrl.u32 %v1710, 7
      %v1712 = vsub.s32 %v1709, %v1711
      %v1713 = vrot.slane %v1706, %v1712
      %v1714 = vcombine.low %v1689, %v1697
      %v1715 = vcombine.high %v1689, %v1697
      %v1717 = vunpack.c.l.s4 1934713408
      %v1718 = vunpack.c.0.s8 %v1717
      %v1719 = vlaneseq
      %v1720 = vshrl.u32 %v1719, 7
      %v1721 = vsub.s32 %v1718, %v1720
      %v1722 = vrot.slane %v1714, %v1721
      %v1724 = vunpack.c.l.s4 1934713408
      %v1725 = vunpack.c.0.s8 %v1724
      %v1726 = vlaneseq
      %v1727 = vshrl.u32 %v1726, 7
      %v1728 = vsub.s32 %v1725, %v1727
      %v1729 = vrot.slane %v1715, %v1728
      %v1730 = vcombine.low %v1705, %v1713
      %v1731 = vcombine.high %v1705, %v1713
      %v1733 = vunpack.c.l.s4 1934713408
      %v1734 = vunpack.c.0.s8 %v1733
      %v1735 = vlaneseq
      %v1736 = vshrl.u32 %v1735, 7
      %v1737 = vsub.s32 %v1734, %v1736
      %v1738 = vrot.slane %v1730, %v1737
      %v1740 = vunpack.c.l.s4 1934713408
      %v1741 = vunpack.c.0.s8 %v1740
      %v1742 = vlaneseq
      %v1743 = vshrl.u32 %v1742, 7
      %v1744 = vsub.s32 %v1741, %v1743
      %v1745 = vrot.slane %v1731, %v1744
      %v1746 = vcombine.low %v1722, %v1738
      %v1747 = vcombine.high %v1722, %v1738
      %v1748 = vcombine.low %v1729, %v1745
      %v1749 = vcombine.high %v1729, %v1745
      %v1750 = vcombine.low %v1654, %v1661
      %v1752 = vunpack.c.l.s4 1983009808
      %v1753 = vunpack.c.0.s8 %v1752
      %v1754 = vlaneseq
      %v1755 = vshrl.u32 %v1754, 7
      %v1756 = vsub.s32 %v1753, %v1755
      %v1757 = vrot.slane %v1750, %v1756
      %v1758 = vcombine.low %v1678, %v1679
      %v1760 = vunpack.c.l.s4 1983009808
      %v1761 = vunpack.c.0.s8 %v1760
      %v1762 = vlaneseq
      %v1763 = vshrl.u32 %v1762, 7
      %v1764 = vsub.s32 %v1761, %v1763
      %v1765 = vrot.slane %v1758, %v1764
      %v1766 = vcombine.low %v1670, %v1677
      %v1768 = vunpack.c.l.s4 1983009808
      %v1769 = vunpack.c.0.s8 %v1768
      %v1770 = vlaneseq
      %v1771 = vshrl.u32 %v1770, 7
      %v1772 = vsub.s32 %v1769, %v1771
      %v1773 = vrot.slane %v1766, %v1772
      %v1774 = vcombine.low %v1680, %v1681
      %v1776 = vunpack.c.l.s4 1983009808
      %v1777 = vunpack.c.0.s8 %v1776
      %v1778 = vlaneseq
      %v1779 = vshrl.u32 %v1778, 7
      %v1780 = vsub.s32 %v1777, %v1779
      %v1781 = vrot.slane %v1774, %v1780
      %v1782 = vcombine.low %v1757, %v1765
      %v1783 = vcombine.high %v1757, %v1765
      %v1785 = vunpack.c.l.s4 1934713408
      %v1786 = vunpack.c.0.s8 %v1785
      %v1787 = vlaneseq
      %v1788 = vshrl.u32 %v1787, 7
      %v1789 = vsub.s32 %v1786, %v1788
      %v1790 = vrot.slane %v1782, %v1789
      %v1792 = vunpack.c.l.s4 1934713408
      %v1793 = vunpack.c.0.s8 %v1792
      %v1794 = vlaneseq
      %v1795 = vshrl.u32 %v1794, 7
      %v1796 = vsub.s32 %v1793, %v1795
      %v1797 = vrot.slane %v1783, %v1796
      %v1798 = vcombine.low %v1773, %v1781
      %v1799 = vcombine.high %v1773, %v1781
      %v1801 = vunpack.c.l.s4 1934713408
      %v1802 = vunpack.c.0.s8 %v1801
      %v1803 = vlaneseq
      %v1804 = vshrl.u32 %v1803, 7
      %v1805 = vsub.s32 %v1802, %v1804
      %v1806 = vrot.slane %v1798, %v1805
      %v1808 = vunpack.c.l.s4 1934713408
      %v1809 = vunpack.c.0.s8 %v1808
      %v1810 = vlaneseq
      %v1811 = vshrl.u32 %v1810, 7
      %v1812 = vsub.s32 %v1809, %v1811
      %v1813 = vrot.slane %v1799, %v1812
      %v1814 = vcombine.low %v1790, %v1806
      %v1815 = vcombine.high %v1790, %v1806
      %v1816 = vcombine.low %v1797, %v1813
      %v1817 = vcombine.high %v1797, %v1813
      %1820 = vrot.lane.b32.xlu0 %v1747, 8
      %v1821 = vpop.permute.xlu0 %1820
      %1822 = vrot.lane.b32.xlu0 %v1815, 8
      %v1823 = vpop.permute.xlu0 %1822
      %1828 = vrot.lane.b32.xlu0 %v1748, 16
      %v1829 = vpop.permute.xlu0 %1828
      %1830 = vrot.lane.b32.xlu0 %v1816, 16
      %v1831 = vpop.permute.xlu0 %1830
      %1836 = vrot.lane.b32.xlu0 %v1749, 24
      %v1837 = vpop.permute.xlu0 %1836
      %1838 = vrot.lane.b32.xlu0 %v1817, 24
      %v1839 = vpop.permute.xlu0 %1838
      %v1842 = vsel %vm789, %v1746, %v1821
      %v1843 = vsel %vm789, %v1814, %v1823
      %vm1844 = vcmask 130048
      %v1845 = vsel %vm1844, %v1842, %v1829
      %v1846 = vsel %vm1844, %v1843, %v1831
      %vm1847 = vcmask 195584
      %v1848 = vsel %vm1847, %v1845, %v1837
      %v1849 = vsel %vm1847, %v1846, %v1839
      %vm1850 = vcmask 261120
      %1851 = vst.msk [vmem:[%s198] sm:$0xff] %vm1850, %v1848
      %1852 = vst.msk [vmem:[%s198 + $0x8] sm:$0xff] %vm1850, %v1849
      %s1853 = smul.u32 2, %s18
      %p1854 = scmp.lt.s32.totalorder %s17, 1
      %s1855 = scalar_select %p1854, %s17, 1
      %p1856 = scmp.lt.s32.totalorder %s1853, 1
      %s1857 = scalar_select %p1856, %s1853, 1
      %s1858 = smul.addr %s1855, 2
      %s1859 = sadd.s32 %s1857, %s1858
      %s1860 = smul.addr %s1859, 8
      %s1861 = scalar_lea.vmem %s2, %s1860
      // Predicated region
      $region29: #{cross_attention_forward.6} parent=27 // pred_check
        %p1862 = pneg %p99
      $region30: #{cross_attention_forward.6} parent=27 // pred_check_branch
        %1864 = sbr.rel (%p1862) target = $region32
      $region31: #{cross_attention_forward.6} parent=27 // pred_region
        %s1865 = smul.u32 2, %s18
      $region32: #{cross_attention_forward.6} parent=27 // pred_fallthru
        _
    $region28: #{cross_attention_forward.6} parent=5 // pred_fallthru
      _
    %p1866 = scmp.le.s32.totalorder 2, %s8
    // Predicated region
    $region33: #{cross_attention_forward.6} parent=5 // pred_check
      %p1867 = pneg %p1866
    $region34: #{cross_attention_forward.6} parent=5 // pred_check_branch
      %1869 = sbr.rel (%p1867) target = $region36
    $region35: #{cross_attention_forward.6} parent=5 // pred_region
      %s1870 = ssub.s32 %s8, 2
      // Predicated region
      $region37: #{cross_attention_forward.6} parent=35 // pred_check
        %p1871 = pneg %p105
      $region38: #{cross_attention_forward.6} parent=35 // pred_check_branch
        %1873 = sbr.rel (%p1871) target = $region40
      $region39: #{cross_attention_forward.6} parent=35 // pred_region
        %s1874 = smul.u32 2, %s20
        %p1875 = scmp.lt.s32.totalorder %s19, 1
        %s1876 = scalar_select %p1875, %s19, 1
        %p1877 = scmp.lt.s32.totalorder %s1874, 1
        %s1878 = scalar_select %p1877, %s1874, 1
        %s1879 = smul.addr %s1876, 2
        %s1880 = sadd.s32 %s1878, %s1879
        %s1881 = smul.addr %s1880, 8
        %s1882 = scalar_lea.vmem %s2, %s1881
      $region40: #{cross_attention_forward.6} parent=35 // pred_fallthru
        _
    $region36: #{cross_attention_forward.6} parent=5 // pred_fallthru
      _
  $region6: #{cross_attention_forward.6} parent=0 // loop_footer
    %s12 = sadd.s32 1, %s8
  $region7: #{cross_attention_forward.6} parent=0 // loop_footer_branch
    %7 = sbr.rel target = $region3
  $region8: #{cross_attention_forward.6} parent=0 // loop_exit
    _

</llo_original>
